<compile_context>
chip_gen: v6e
topology: v6e:2x2x1
jax: 0.10.0
libtpu: 0.0.40
codegen_flags: <defaults>
</compile_context>

<pallas_src>
import functools

import jax
import jax.numpy as jnp
from jax.experimental import pallas as pl
from jax.experimental.pallas import tpu as pltpu

LANE = 128
TILE_ALIGN = 16          # bf16 sublane packing -> keep batch tiles % 16 == 0


def _round_up(x, m):
    return (x + m - 1) // m * m


def _pick_batch_tile(B):
    """Pick the batch tile TB.

    Preference order: a multiple of 16 that divides B exactly (no wrapper pad)
    and yields >= 2 grid steps (v7x megacore), as large as possible up to 512
    rows (amortizes per-grid-step overhead on v5e/v6e). Falls back to a padded
    ragged tail only when B has no suitable divisor.
    """
    if B <= TILE_ALIGN:
        return TILE_ALIGN
    best_single = None
    for cand in range(512, TILE_ALIGN - 1, -TILE_ALIGN):
        if B % cand == 0:
            if B // cand >= 2:
                return cand
            if best_single is None:
                best_single = cand
    if best_single is not None:
        return best_single
    return min(512, _round_up(pl.cdiv(B, 2), TILE_ALIGN))


def vae_kernel(x_ref, eps_ref,
               w1_ref, b1_ref, wlat_ref, blat_ref,
               wd1_ref, bd1_ref, wd2_ref, bd2_ref,
               recon_ref, lat_ref, *, d_latent):
    """One batch tile of the full VAE forward (encoder + sampling + decoder)."""
    # ---- encoder ----
    # x_ref is already bf16 (cast in the wrapper); accumulate in f32.
    h = jnp.dot(x_ref[...], w1_ref[...],
                preferred_element_type=jnp.float32) + b1_ref[...]
    h = jnp.maximum(h, 0.0)                                   # ReLU (f32 VPU)

    # Fused mean/log_var projection -> lane-dense (TB, 128) slab:
    #   lanes [0:L) = mean, [L:2L) = log_var, rest exact zeros.
    lat = jnp.dot(h.astype(jnp.bfloat16), wlat_ref[...],
                  preferred_element_type=jnp.float32) + blat_ref[...]
    lat_ref[...] = lat                                        # unmasked f32 vst

    # ---- sampling layer (reparameterization trick), f32, full 128-lane slab.
    # Rotate log_var lanes onto the mean lanes (XLU lane rotation, free slot).
    lat_pad = lat.shape[-1]
    log_var_rot = pltpu.roll(lat, shift=lat_pad - d_latent, axis=1)
    # eps_ref is zero beyond lane L, so junk lanes of z_slab are just `lat`;
    # they are annihilated below by the zero rows (>= L) of wd1.
    z_slab = lat + jnp.exp(0.5 * log_var_rot) * eps_ref[...]

    # ---- decoder ----
    hd = jnp.dot(z_slab.astype(jnp.bfloat16), wd1_ref[...],
                 preferred_element_type=jnp.float32) + bd1_ref[...]
    hd = jnp.maximum(hd, 0.0)                                 # ReLU
    logits = jnp.dot(hd.astype(jnp.bfloat16), wd2_ref[...],
                     preferred_element_type=jnp.float32) + bd2_ref[...]
    recon_ref[...] = jax.nn.sigmoid(logits).astype(recon_ref.dtype)   # bf16 out


def vae_forward(x_nchw, eps, params):
    """x_nchw: (B, C, H, W) f32.  Returns (recon_nchw f32, z_mean, z_log_var)."""
    B, C, H, W = x_nchw.shape
    D = C * H * W
    L = params["d_latent"]
    lat_pad = params["blat"].shape[-1]
    d_hidden = params["b1"].shape[-1]

    # Static invariants the kernel silently relies on (padding / fusion layout).
    assert lat_pad % LANE == 0 and lat_pad >= 2 * L
    assert params["wlat"].shape == (d_hidden, lat_pad)
    assert params["wd1"].shape == (lat_pad, d_hidden), "wd1 must be zero-padded to lat_pad rows"
    assert eps.shape == (B, L)

    # bf16 input stream (halves input HBM traffic; MXU inputs were bf16 anyway).
    x_flat = x_nchw.reshape(B, D).astype(jnp.bfloat16)
    # eps padded to a lane-dense 128-wide slab (zero beyond lane L), f32.
    eps_pad = jnp.zeros((B, lat_pad), jnp.float32).at[:, :L].set(eps)

    tb = _pick_batch_tile(B)
    b_pad = _round_up(B, tb)
    if b_pad != B:                     # only for ragged B with no good divisor
        x_flat = jnp.pad(x_flat, ((0, b_pad - B), (0, 0)))
        eps_pad = jnp.pad(eps_pad, ((0, b_pad - B), (0, 0)))

    grid = (b_pad // tb,)

    def act_spec(last):                                       # walks the batch
        return pl.BlockSpec((tb, last), lambda i: (i, 0))

    def res_spec(shape):                                      # weight-resident
        return pl.BlockSpec(shape, lambda i: (0, 0))

    kernel = functools.partial(vae_kernel, d_latent=L)

    weight_bytes = 2 * (D * d_hidden + d_hidden * lat_pad + lat_pad * d_hidden
                        + d_hidden * D) + 4 * (2 * d_hidden + lat_pad + D)
    cost = pl.CostEstimate(
        flops=2 * b_pad * (D * d_hidden + d_hidden * lat_pad
                           + lat_pad * d_hidden + d_hidden * D),
        transcendentals=b_pad * (lat_pad + D),
        bytes_accessed=(b_pad * D * 2          # x (bf16)
                        + b_pad * lat_pad * 4  # eps (f32)
                        + b_pad * D * 2        # recon (bf16)
                        + b_pad * lat_pad * 4  # lat (f32)
                        + weight_bytes))

    recon_flat, lat = pl.pallas_call(
        kernel,
        grid=grid,
        out_shape=(
            jax.ShapeDtypeStruct((b_pad, D), jnp.bfloat16),    # recon (bf16 writeback)
            jax.ShapeDtypeStruct((b_pad, lat_pad), jnp.float32),
        ),
        in_specs=[
            act_spec(D),                                      # x (bf16)
            act_spec(lat_pad),                                # eps (lane-dense)
            res_spec((D, d_hidden)),                          # w1
            res_spec((1, d_hidden)),                          # b1
            res_spec((d_hidden, lat_pad)),                    # wlat (mu|logvar|0)
            res_spec((1, lat_pad)),                           # blat
            res_spec((lat_pad, d_hidden)),                    # wd1 (zero rows >= L)
            res_spec((1, d_hidden)),                          # bd1
            res_spec((d_hidden, D)),                          # wd2
            res_spec((1, D)),                                 # bd2
        ],
        out_specs=(act_spec(D), act_spec(lat_pad)),
        compiler_params=pltpu.CompilerParams(
            dimension_semantics=("parallel",),                # megacore on v7x
            vmem_limit_bytes=64 * 1024 * 1024),
        cost_estimate=cost,
    )(x_flat, eps_pad,
      params["w1"], params["b1"], params["wlat"], params["blat"],
      params["wd1"], params["bd1"], params["wd2"], params["bd2"])

    recon = recon_flat[:B].astype(jnp.float32).reshape(B, C, H, W)
    z_mean = lat[:B, :L]
    z_log_var = lat[:B, L:2 * L]
    return recon, z_mean, z_log_var


def init_params(key, d_in, d_hidden, d_latent):
    """bf16 weights / f32 biases.  mean & log_var projections fused + lane-padded
    to 128 columns; decoder's first weight zero-padded to 128 rows so the kernel
    can feed a full lane-dense latent slab into the MXU."""
    ks = jax.random.split(key, 5)
    scale = lambda fan_in: 1.0 / jnp.sqrt(jnp.float32(fan_in))

    w1 = jax.random.normal(ks[0], (d_in, d_hidden), jnp.float32) * scale(d_in)
    wmu = jax.random.normal(ks[1], (d_hidden, d_latent), jnp.float32) * scale(d_hidden)
    wlv = jax.random.normal(ks[2], (d_hidden, d_latent), jnp.float32) * scale(d_hidden)
    wd1 = jax.random.normal(ks[3], (d_latent, d_hidden), jnp.float32) * scale(d_latent)
    wd2 = jax.random.normal(ks[4], (d_hidden, d_in), jnp.float32) * scale(d_hidden)

    lat_pad = _round_up(2 * d_latent, LANE)
    wlat = jnp.zeros((d_hidden, lat_pad), jnp.float32)
    wlat = wlat.at[:, :d_latent].set(wmu).at[:, d_latent:2 * d_latent].set(wlv)
    blat = jnp.zeros((1, lat_pad), jnp.float32)
    wd1_pad = jnp.zeros((lat_pad, d_hidden), jnp.float32).at[:d_latent].set(wd1)

    return {
        "w1": w1.astype(jnp.bfloat16),
        "b1": jnp.zeros((1, d_hidden), jnp.float32),
        "wlat": wlat.astype(jnp.bfloat16),
        "blat": blat,
        "wd1": wd1_pad.astype(jnp.bfloat16),
        "bd1": jnp.zeros((1, d_hidden), jnp.float32),
        "wd2": wd2.astype(jnp.bfloat16),
        "bd2": jnp.zeros((1, d_in), jnp.float32),
        "d_latent": d_latent,
    }


def vae_forward_ref(x_nchw, eps, params):
    """Pure-JAX reference (same bf16-quantized operands, f32 math)."""
    B = x_nchw.shape[0]
    L = params["d_latent"]
    x = x_nchw.reshape(B, -1)

    def mm(a, w_bf16):
        return jnp.dot(a.astype(jnp.bfloat16).astype(jnp.float32),
                       w_bf16.astype(jnp.float32))

    h = jnp.maximum(mm(x, params["w1"]) + params["b1"], 0.0)
    lat = mm(h, params["wlat"]) + params["blat"]
    z_mean = lat[:, :L]
    z_log_var = lat[:, L:2 * L]
    z = z_mean + jnp.exp(0.5 * z_log_var) * eps
    hd = jnp.maximum(mm(z, params["wd1"][:L]) + params["bd1"], 0.0)
    recon = jax.nn.sigmoid(mm(hd, params["wd2"]) + params["bd2"])
    return recon.reshape(x_nchw.shape), z_mean, z_log_var


if __name__ == "__main__":
    B, C, H, W = 2, 4, 16, 16        # small NCHW input, as in the PyTorch module
    D = C * H * W                    # 1024
    D_HIDDEN = 128
    D_LATENT = 16

    key = jax.random.PRNGKey(0)
    k_x, k_eps, k_param = jax.random.split(key, 3)

    # deterministic input in [0, 1] (BCE target range for a VAE)
    x = jax.random.uniform(k_x, (B, C, H, W), jnp.float32)
    # deterministic "noise" for the sampling layer
    eps = jax.random.normal(k_eps, (B, D_LATENT), jnp.float32)
    params = init_params(k_param, D, D_HIDDEN, D_LATENT)

    fwd = jax.jit(lambda xx, ee: vae_forward(xx, ee, params))
    recon, z_mean, z_log_var = jax.block_until_ready(fwd(x, eps))

    # sanity check against the pure-JAX reference (same bf16 weight quantization;
    # recon is written back in bf16, hence the looser tolerance there)
    recon_r, z_mean_r, z_log_var_r = vae_forward_ref(x, eps, params)
    assert recon.shape == (B, C, H, W)
    assert z_mean.shape == (B, D_LATENT) and z_log_var.shape == (B, D_LATENT)
    assert jnp.allclose(recon, recon_r, atol=1e-2)
    assert jnp.allclose(z_mean, z_mean_r, atol=5e-3)
    assert jnp.allclose(z_log_var, z_log_var_r, atol=5e-3)

    # TODO(synk): vae_loss (sum-reduced BCE + KL) is a training-time scalar, not
    # part of forward(); left out of the kernel.
    print("KERNEL_OK")
</pallas_src>

<mosaic_0001>
module attributes {stable_mosaic.version = 11 : i64} {
  func.func @vae_kernel(%arg0: i32, %arg1: memref<16x1024xbf16, #tpu.memory_space<vmem>>, %arg2: memref<16x128xf32, #tpu.memory_space<vmem>>, %arg3: memref<1024x128xbf16, #tpu.memory_space<vmem>>, %arg4: memref<1x128xf32, #tpu.memory_space<vmem>>, %arg5: memref<128x128xbf16, #tpu.memory_space<vmem>>, %arg6: memref<1x128xf32, #tpu.memory_space<vmem>>, %arg7: memref<128x128xbf16, #tpu.memory_space<vmem>>, %arg8: memref<1x128xf32, #tpu.memory_space<vmem>>, %arg9: memref<128x1024xbf16, #tpu.memory_space<vmem>>, %arg10: memref<1x1024xf32, #tpu.memory_space<vmem>>, %arg11: memref<16x1024xbf16, #tpu.memory_space<vmem>>, %arg12: memref<16x128xf32, #tpu.memory_space<vmem>>) attributes {dimension_semantics = [#tpu.dimension_semantics<parallel>], iteration_bounds = array<i64: 1>, scalar_prefetch = 0 : i64, scratch_operands = 0 : i64, tpu.core_type = #tpu.core_type<tc>, window_params = [{transform_indices = @transform_0, window_bounds = array<i64: 16, 1024>}, {transform_indices = @transform_1, window_bounds = array<i64: 16, 128>}, {pipeline_mode = #tpu.pipeline_mode<synchronous>, transform_indices = @transform_2, window_bounds = array<i64: 1024, 128>}, {pipeline_mode = #tpu.pipeline_mode<synchronous>, transform_indices = @transform_3, window_bounds = array<i64: 1, 128>}, {pipeline_mode = #tpu.pipeline_mode<synchronous>, transform_indices = @transform_4, window_bounds = array<i64: 128, 128>}, {pipeline_mode = #tpu.pipeline_mode<synchronous>, transform_indices = @transform_5, window_bounds = array<i64: 1, 128>}, {pipeline_mode = #tpu.pipeline_mode<synchronous>, transform_indices = @transform_6, window_bounds = array<i64: 128, 128>}, {pipeline_mode = #tpu.pipeline_mode<synchronous>, transform_indices = @transform_7, window_bounds = array<i64: 1, 128>}, {pipeline_mode = #tpu.pipeline_mode<synchronous>, transform_indices = @transform_8, window_bounds = array<i64: 128, 1024>}, {pipeline_mode = #tpu.pipeline_mode<synchronous>, transform_indices = @transform_9, window_bounds = array<i64: 1, 1024>}, {transform_indices = @transform_10, window_bounds = array<i64: 16, 1024>}, {transform_indices = @transform_11, window_bounds = array<i64: 16, 128>}]} {
    %c0 = arith.constant 0 : index
    %c0_0 = arith.constant 0 : index
    %0 = vector.load %arg1[%c0, %c0_0] : memref<16x1024xbf16, #tpu.memory_space<vmem>>, vector<16x1024xbf16>
    %c0_1 = arith.constant 0 : index
    %c0_2 = arith.constant 0 : index
    %1 = vector.load %arg3[%c0_1, %c0_2] : memref<1024x128xbf16, #tpu.memory_space<vmem>>, vector<1024x128xbf16>
    %cst = arith.constant dense<0.000000e+00> : vector<16x128xf32>
    %2 = tpu.matmul %0, %1, %cst {dimension_numbers = #tpu.dot_dimension_numbers<[1], [0], [0], [1], [0, 0, 1, 1], [], []>} : vector<16x1024xbf16>, vector<1024x128xbf16>, vector<16x128xf32> -> vector<16x128xf32>
    %c0_3 = arith.constant 0 : index
    %c0_4 = arith.constant 0 : index
    %3 = vector.load %arg4[%c0_3, %c0_4] : memref<1x128xf32, #tpu.memory_space<vmem>>, vector<1x128xf32>
    %4 = vector.broadcast %3 : vector<1x128xf32> to vector<16x128xf32>
    %5 = arith.addf %2, %4 : vector<16x128xf32>
    %cst_5 = arith.constant 0.000000e+00 : f32
    %6 = vector.broadcast %cst_5 : f32 to vector<16x128xf32>
    %7 = arith.maximumf %5, %6 : vector<16x128xf32>
    %8 = arith.truncf %7 : vector<16x128xf32> to vector<16x128xbf16>
    %c0_6 = arith.constant 0 : index
    %c0_7 = arith.constant 0 : index
    %9 = vector.load %arg5[%c0_6, %c0_7] : memref<128x128xbf16, #tpu.memory_space<vmem>>, vector<128x128xbf16>
    %cst_8 = arith.constant dense<0.000000e+00> : vector<16x128xf32>
    %10 = tpu.matmul %8, %9, %cst_8 {dimension_numbers = #tpu.dot_dimension_numbers<[1], [0], [0], [1], [0, 0, 1, 1], [], []>} : vector<16x128xbf16>, vector<128x128xbf16>, vector<16x128xf32> -> vector<16x128xf32>
    %c0_9 = arith.constant 0 : index
    %c0_10 = arith.constant 0 : index
    %11 = vector.load %arg6[%c0_9, %c0_10] : memref<1x128xf32, #tpu.memory_space<vmem>>, vector<1x128xf32>
    %12 = vector.broadcast %11 : vector<1x128xf32> to vector<16x128xf32>
    %13 = arith.addf %10, %12 : vector<16x128xf32>
    %c0_11 = arith.constant 0 : index
    %c0_12 = arith.constant 0 : index
    %14 = vector.load %arg12[%c0_11, %c0_12] : memref<16x128xf32, #tpu.memory_space<vmem>>, vector<16x128xf32>
    tpu.vector_store %arg12[%c0_11, %c0_12], %13 {strides = array<i32>} : memref<16x128xf32, #tpu.memory_space<vmem>>, vector<16x128xf32>,
    %c112_i32 = arith.constant 112 : i32
    %15 = tpu.dynamic_rotate %13 by %c112_i32 dim 1 : vector<16x128xf32>, i32 -> vector<16x128xf32>
    %cst_13 = arith.constant 5.000000e-01 : f32
    %16 = vector.broadcast %cst_13 : f32 to vector<16x128xf32>
    %17 = arith.mulf %16, %15 : vector<16x128xf32>
    %18 = math.exp %17 : vector<16x128xf32>
    %c0_14 = arith.constant 0 : index
    %c0_15 = arith.constant 0 : index
    %19 = vector.load %arg2[%c0_14, %c0_15] : memref<16x128xf32, #tpu.memory_space<vmem>>, vector<16x128xf32>
    %20 = arith.mulf %18, %19 : vector<16x128xf32>
    %21 = arith.addf %13, %20 : vector<16x128xf32>
    %22 = arith.truncf %21 : vector<16x128xf32> to vector<16x128xbf16>
    %c0_16 = arith.constant 0 : index
    %c0_17 = arith.constant 0 : index
    %23 = vector.load %arg7[%c0_16, %c0_17] : memref<128x128xbf16, #tpu.memory_space<vmem>>, vector<128x128xbf16>
    %cst_18 = arith.constant dense<0.000000e+00> : vector<16x128xf32>
    %24 = tpu.matmul %22, %23, %cst_18 {dimension_numbers = #tpu.dot_dimension_numbers<[1], [0], [0], [1], [0, 0, 1, 1], [], []>} : vector<16x128xbf16>, vector<128x128xbf16>, vector<16x128xf32> -> vector<16x128xf32>
    %c0_19 = arith.constant 0 : index
    %c0_20 = arith.constant 0 : index
    %25 = vector.load %arg8[%c0_19, %c0_20] : memref<1x128xf32, #tpu.memory_space<vmem>>, vector<1x128xf32>
    %26 = vector.broadcast %25 : vector<1x128xf32> to vector<16x128xf32>
    %27 = arith.addf %24, %26 : vector<16x128xf32>
    %cst_21 = arith.constant 0.000000e+00 : f32
    %28 = vector.broadcast %cst_21 : f32 to vector<16x128xf32>
    %29 = arith.maximumf %27, %28 : vector<16x128xf32>
    %30 = arith.truncf %29 : vector<16x128xf32> to vector<16x128xbf16>
    %c0_22 = arith.constant 0 : index
    %c0_23 = arith.constant 0 : index
    %31 = vector.load %arg9[%c0_22, %c0_23] : memref<128x1024xbf16, #tpu.memory_space<vmem>>, vector<128x1024xbf16>
    %cst_24 = arith.constant dense<0.000000e+00> : vector<16x1024xf32>
    %32 = tpu.matmul %30, %31, %cst_24 {dimension_numbers = #tpu.dot_dimension_numbers<[1], [0], [0], [1], [0, 0, 1, 1], [], []>} : vector<16x128xbf16>, vector<128x1024xbf16>, vector<16x1024xf32> -> vector<16x1024xf32>
    %c0_25 = arith.constant 0 : index
    %c0_26 = arith.constant 0 : index
    %33 = vector.load %arg10[%c0_25, %c0_26] : memref<1x1024xf32, #tpu.memory_space<vmem>>, vector<1x1024xf32>
    %34 = vector.broadcast %33 : vector<1x1024xf32> to vector<16x1024xf32>
    %35 = arith.addf %32, %34 : vector<16x1024xf32>
    %36 = arith.negf %35 : vector<16x1024xf32>
    %37 = math.exp %36 : vector<16x1024xf32>
    %cst_27 = arith.constant 1.000000e+00 : f32
    %38 = vector.broadcast %cst_27 : f32 to vector<16x1024xf32>
    %39 = arith.addf %38, %37 : vector<16x1024xf32>
    %40 = arith.divf %38, %39 : vector<16x1024xf32>
    %41 = arith.truncf %40 : vector<16x1024xf32> to vector<16x1024xbf16>
    %c0_28 = arith.constant 0 : index
    %c0_29 = arith.constant 0 : index
    %42 = vector.load %arg11[%c0_28, %c0_29] : memref<16x1024xbf16, #tpu.memory_space<vmem>>, vector<16x1024xbf16>
    tpu.vector_store %arg11[%c0_28, %c0_29], %41 {strides = array<i32>} : memref<16x1024xbf16, #tpu.memory_space<vmem>>, vector<16x1024xbf16>,
    return
  }
  func.func @transform_0(%arg0: i32) -> (i32, i32) {
    %c0_i32 = arith.constant 0 : i32
    %c0_i32_0 = arith.constant 0 : i32
    return %arg0, %c0_i32 : i32, i32
  }
  func.func @transform_1(%arg0: i32) -> (i32, i32) {
    %c0_i32 = arith.constant 0 : i32
    %c0_i32_0 = arith.constant 0 : i32
    return %arg0, %c0_i32 : i32, i32
  }
  func.func @transform_2(%arg0: i32) -> (i32, i32) {
    %c0_i32 = arith.constant 0 : i32
    %c0_i32_0 = arith.constant 0 : i32
    %c0_i32_1 = arith.constant 0 : i32
    return %c0_i32, %c0_i32_0 : i32, i32
  }
  func.func @transform_3(%arg0: i32) -> (i32, i32) {
    %c0_i32 = arith.constant 0 : i32
    %c0_i32_0 = arith.constant 0 : i32
    %c0_i32_1 = arith.constant 0 : i32
    return %c0_i32, %c0_i32_0 : i32, i32
  }
  func.func @transform_4(%arg0: i32) -> (i32, i32) {
    %c0_i32 = arith.constant 0 : i32
    %c0_i32_0 = arith.constant 0 : i32
    %c0_i32_1 = arith.constant 0 : i32
    return %c0_i32, %c0_i32_0 : i32, i32
  }
  func.func @transform_5(%arg0: i32) -> (i32, i32) {
    %c0_i32 = arith.constant 0 : i32
    %c0_i32_0 = arith.constant 0 : i32
    %c0_i32_1 = arith.constant 0 : i32
    return %c0_i32, %c0_i32_0 : i32, i32
  }
  func.func @transform_6(%arg0: i32) -> (i32, i32) {
    %c0_i32 = arith.constant 0 : i32
    %c0_i32_0 = arith.constant 0 : i32
    %c0_i32_1 = arith.constant 0 : i32
    return %c0_i32, %c0_i32_0 : i32, i32
  }
  func.func @transform_7(%arg0: i32) -> (i32, i32) {
    %c0_i32 = arith.constant 0 : i32
    %c0_i32_0 = arith.constant 0 : i32
    %c0_i32_1 = arith.constant 0 : i32
    return %c0_i32, %c0_i32_0 : i32, i32
  }
  func.func @transform_8(%arg0: i32) -> (i32, i32) {
    %c0_i32 = arith.constant 0 : i32
    %c0_i32_0 = arith.constant 0 : i32
    %c0_i32_1 = arith.constant 0 : i32
    return %c0_i32, %c0_i32_0 : i32, i32
  }
  func.func @transform_9(%arg0: i32) -> (i32, i32) {
    %c0_i32 = arith.constant 0 : i32
    %c0_i32_0 = arith.constant 0 : i32
    %c0_i32_1 = arith.constant 0 : i32
    return %c0_i32, %c0_i32_0 : i32, i32
  }
  func.func @transform_10(%arg0: i32) -> (i32, i32) {
    %c0_i32 = arith.constant 0 : i32
    %c0_i32_0 = arith.constant 0 : i32
    return %arg0, %c0_i32 : i32, i32
  }
  func.func @transform_11(%arg0: i32) -> (i32, i32) {
    %c0_i32 = arith.constant 0 : i32
    %c0_i32_0 = arith.constant 0 : i32
    return %arg0, %c0_i32 : i32, i32
  }
}

</mosaic_0001>

<llo_original>
// kernel: _lambda_.1
$region0: #{_lambda_.1}
  #allocation0 [shape = 'u32[]', space=smem, size = 0x4, offset = 0x4, fixed_abs, tag = 'smem constant byte address 0x4 - core index']
  #allocation1 [shape = 'u32[144,128]{1,0:T(1,128)}', space=vmem, size = 0x12000, scoped, tag = 'internal scratch']
  %s0 = inlined_call_operand.vmem [shape: bf16[16,1024], index: 0, kind: input, shape index: {}]
  %s1 = inlined_call_operand.vmem [shape: f32[16,128], index: 1, kind: input, shape index: {}]
  %s2 = inlined_call_operand.hbm [shape: bf16[1024,128], index: 2, kind: input, shape index: {}]
  %s3 = inlined_call_operand.vmem [shape: f32[1,128], index: 3, kind: input, shape index: {}, may-alias: {3,5,7}]
  %s4 = inlined_call_operand.vmem [shape: bf16[128,128], index: 4, kind: input, shape index: {}]
  %s5 = inlined_call_operand.vmem [shape: f32[1,128], index: 5, kind: input, shape index: {}, may-alias: {3,5,7}]
  %s6 = inlined_call_operand.vmem [shape: bf16[128,128], index: 6, kind: input, shape index: {}]
  %s7 = inlined_call_operand.vmem [shape: f32[1,128], index: 7, kind: input, shape index: {}, may-alias: {3,5,7}]
  %s8 = inlined_call_operand.hbm [shape: bf16[128,1024], index: 8, kind: input, shape index: {}]
  %s9 = inlined_call_operand.vmem [shape: f32[1,1024], index: 9, kind: input, shape index: {}]
  %s10 = inlined_call_operand.vmem [shape: bf16[16,1024], index: 10, kind: output, shape index: {0}]
  %s11 = inlined_call_operand.vmem [shape: f32[16,128], index: 11, kind: output, shape index: {1}]
  %12 = xla_tuple %s10, %s11
  %s13 = sld [smem:[#allocation0]]
  $region66: #{_lambda_.1} parent=0
    _
  %s15 = ssub.s32 1, %s13
  %s16 = scalar_select 0, %s15, %s13
  $region1: #{_lambda_.1} parent=0
    #allocation2 [shape = 'u8[262144]{0}', space=vmem, size = 0x40000, scoped, tag = 'input window, operand 2, single buffered']
    #allocation3 [shape = 's32[1]{0}', space=sflag, size = 0x4, scoped, tag = 'scoped memory for _lambda_.1']
    #allocation4 [shape = 'u8[262144]{0}', space=vmem, size = 0x40000, scoped, tag = 'input window, operand 8, single buffered']
    #allocation5 [shape = 's32[1]{0}', space=sflag, size = 0x4, scoped, tag = 'scoped memory for _lambda_.1']
    %17 = vsyncpa [#allocation3], 0
    %18 = vsyncpa [#allocation5], 0
    // Predicated region
    $region2: #{_lambda_.1} parent=1 // pred_check
      _
    $region3: #{_lambda_.1} parent=1 // pred_check_branch
      %20 = sbr.rel (0) target = $region5
    $region4: #{_lambda_.1} parent=1 // pred_region
      _
    $region5: #{_lambda_.1} parent=1 // pred_fallthru
      _
    // Predicated region
    $region6: #{_lambda_.1} parent=1 // pred_check
      _
    $region7: #{_lambda_.1} parent=1 // pred_check_branch
      %22 = sbr.rel (0) target = $region9
    $region8: #{_lambda_.1} parent=1 // pred_region
      _
    $region9: #{_lambda_.1} parent=1 // pred_fallthru
      _
    // Predicated region
    $region10: #{_lambda_.1} parent=1 // pred_check
      _
    $region11: #{_lambda_.1} parent=1 // pred_check_branch
      %24 = sbr.rel (0) target = $region13
    $region12: #{_lambda_.1} parent=1 // pred_region
      %s26 = ssub.s32 8192, 8192
      %27 = vsyncadd [#allocation3], %s26
      %s28 = sshll.u32 [#allocation2], 4
      %s29 = int_to_ptr.vmem [resolvable:$true] %s28
      %34 = dma.hbm_to_vmem [thread:$0]  %s2, 8192, %s29, [#allocation3], 64, 64, 4
    $region13: #{_lambda_.1} parent=1 // pred_fallthru
      _
    // Predicated region
    $region14: #{_lambda_.1} parent=1 // pred_check
      _
    $region15: #{_lambda_.1} parent=1 // pred_check_branch
      %36 = sbr.rel (0) target = $region17
    $region16: #{_lambda_.1} parent=1 // pred_region
      _
    $region17: #{_lambda_.1} parent=1 // pred_fallthru
      _
    // Predicated region
    $region18: #{_lambda_.1} parent=1 // pred_check
      _
    $region19: #{_lambda_.1} parent=1 // pred_check_branch
      %38 = sbr.rel (0) target = $region21
    $region20: #{_lambda_.1} parent=1 // pred_region
      _
    $region21: #{_lambda_.1} parent=1 // pred_fallthru
      _
    // Predicated region
    $region22: #{_lambda_.1} parent=1 // pred_check
      _
    $region23: #{_lambda_.1} parent=1 // pred_check_branch
      %40 = sbr.rel (0) target = $region25
    $region24: #{_lambda_.1} parent=1 // pred_region
      _
    $region25: #{_lambda_.1} parent=1 // pred_fallthru
      _
    // Predicated region
    $region26: #{_lambda_.1} parent=1 // pred_check
      _
    $region27: #{_lambda_.1} parent=1 // pred_check_branch
      %42 = sbr.rel (0) target = $region29
    $region28: #{_lambda_.1} parent=1 // pred_region
      _
    $region29: #{_lambda_.1} parent=1 // pred_fallthru
      _
    // Predicated region
    $region30: #{_lambda_.1} parent=1 // pred_check
      _
    $region31: #{_lambda_.1} parent=1 // pred_check_branch
      %44 = sbr.rel (0) target = $region33
    $region32: #{_lambda_.1} parent=1 // pred_region
      _
    $region33: #{_lambda_.1} parent=1 // pred_fallthru
      _
    // Predicated region
    $region34: #{_lambda_.1} parent=1 // pred_check
      _
    $region35: #{_lambda_.1} parent=1 // pred_check_branch
      %46 = sbr.rel (0) target = $region37
    $region36: #{_lambda_.1} parent=1 // pred_region
      %s48 = ssub.s32 8192, 8192
      %49 = vsyncadd [#allocation5], %s48
      %s50 = sshll.u32 [#allocation4], 4
      %s51 = int_to_ptr.vmem [resolvable:$true] %s50
      %56 = dma.hbm_to_vmem [thread:$0]  %s8, 8192, %s51, [#allocation5], 512, 512, 32
    $region37: #{_lambda_.1} parent=1 // pred_fallthru
      _
    // Predicated region
    $region38: #{_lambda_.1} parent=1 // pred_check
      _
    $region39: #{_lambda_.1} parent=1 // pred_check_branch
      %58 = sbr.rel (0) target = $region41
    $region40: #{_lambda_.1} parent=1 // pred_region
      _
    $region41: #{_lambda_.1} parent=1 // pred_fallthru
      _
    // Predicated region
    $region42: #{_lambda_.1} parent=1 // pred_check
      _
    $region43: #{_lambda_.1} parent=1 // pred_check_branch
      %60 = sbr.rel (0) target = $region45
    $region44: #{_lambda_.1} parent=1 // pred_region
      %61 = dma.done [#allocation3], 8192
    $region45: #{_lambda_.1} parent=1 // pred_fallthru
      _
    // Predicated region
    $region46: #{_lambda_.1} parent=1 // pred_check
      _
    $region47: #{_lambda_.1} parent=1 // pred_check_branch
      %63 = sbr.rel (0) target = $region49
    $region48: #{_lambda_.1} parent=1 // pred_region
      %64 = dma.done [#allocation5], 8192
    $region49: #{_lambda_.1} parent=1 // pred_fallthru
      _
    %v66 = vld [vmem:[%s0] sm:$0xff]
    %v67 = vld [vmem:[%s0 + $0x8] sm:$0xff]
    %v68 = vld [vmem:[%s0 + $0x10] sm:$0xff]
    %v69 = vld [vmem:[%s0 + $0x18] sm:$0xff]
    %v70 = vld [vmem:[%s0 + $0x20] sm:$0xff]
    %v71 = vld [vmem:[%s0 + $0x28] sm:$0xff]
    %v72 = vld [vmem:[%s0 + $0x30] sm:$0xff]
    %v73 = vld [vmem:[%s0 + $0x38] sm:$0xff]
    %v74 = vld [vmem:[#allocation2] sm:$0xf]
    %v75 = vld [vmem:[#allocation2 + $0x4] sm:$0xf]
    %v76 = vld [vmem:[#allocation2 + $0x8] sm:$0xf]
    %v77 = vld [vmem:[#allocation2 + $0xc] sm:$0xf]
    %v78 = vld [vmem:[#allocation2 + $0x10] sm:$0xf]
    %v79 = vld [vmem:[#allocation2 + $0x14] sm:$0xf]
    %v80 = vld [vmem:[#allocation2 + $0x18] sm:$0xf]
    %v81 = vld [vmem:[#allocation2 + $0x1c] sm:$0xf]
    %v82 = vld [vmem:[#allocation2 + $0x20] sm:$0xf]
    %v83 = vld [vmem:[#allocation2 + $0x24] sm:$0xf]
    %v84 = vld [vmem:[#allocation2 + $0x28] sm:$0xf]
    %v85 = vld [vmem:[#allocation2 + $0x2c] sm:$0xf]
    %v86 = vld [vmem:[#allocation2 + $0x30] sm:$0xf]
    %v87 = vld [vmem:[#allocation2 + $0x34] sm:$0xf]
    %v88 = vld [vmem:[#allocation2 + $0x38] sm:$0xf]
    %v89 = vld [vmem:[#allocation2 + $0x3c] sm:$0xf]
    %v90 = vld [vmem:[#allocation2 + $0x40] sm:$0xf]
    %v91 = vld [vmem:[#allocation2 + $0x44] sm:$0xf]
    %v92 = vld [vmem:[#allocation2 + $0x48] sm:$0xf]
    %v93 = vld [vmem:[#allocation2 + $0x4c] sm:$0xf]
    %v94 = vld [vmem:[#allocation2 + $0x50] sm:$0xf]
    %v95 = vld [vmem:[#allocation2 + $0x54] sm:$0xf]
    %v96 = vld [vmem:[#allocation2 + $0x58] sm:$0xf]
    %v97 = vld [vmem:[#allocation2 + $0x5c] sm:$0xf]
    %v98 = vld [vmem:[#allocation2 + $0x60] sm:$0xf]
    %v99 = vld [vmem:[#allocation2 + $0x64] sm:$0xf]
    %v100 = vld [vmem:[#allocation2 + $0x68] sm:$0xf]
    %v101 = vld [vmem:[#allocation2 + $0x6c] sm:$0xf]
    %v102 = vld [vmem:[#allocation2 + $0x70] sm:$0xf]
    %v103 = vld [vmem:[#allocation2 + $0x74] sm:$0xf]
    %v104 = vld [vmem:[#allocation2 + $0x78] sm:$0xf]
    %v105 = vld [vmem:[#allocation2 + $0x7c] sm:$0xf]
    %v106 = vld [vmem:[#allocation2 + $0x80] sm:$0xf]
    %v107 = vld [vmem:[#allocation2 + $0x84] sm:$0xf]
    %v108 = vld [vmem:[#allocation2 + $0x88] sm:$0xf]
    %v109 = vld [vmem:[#allocation2 + $0x8c] sm:$0xf]
    %v110 = vld [vmem:[#allocation2 + $0x90] sm:$0xf]
    %v111 = vld [vmem:[#allocation2 + $0x94] sm:$0xf]
    %v112 = vld [vmem:[#allocation2 + $0x98] sm:$0xf]
    %v113 = vld [vmem:[#allocation2 + $0x9c] sm:$0xf]
    %v114 = vld [vmem:[#allocation2 + $0xa0] sm:$0xf]
    %v115 = vld [vmem:[#allocation2 + $0xa4] sm:$0xf]
    %v116 = vld [vmem:[#allocation2 + $0xa8] sm:$0xf]
    %v117 = vld [vmem:[#allocation2 + $0xac] sm:$0xf]
    %v118 = vld [vmem:[#allocation2 + $0xb0] sm:$0xf]
    %v119 = vld [vmem:[#allocation2 + $0xb4] sm:$0xf]
    %v120 = vld [vmem:[#allocation2 + $0xb8] sm:$0xf]
    %v121 = vld [vmem:[#allocation2 + $0xbc] sm:$0xf]
    %v122 = vld [vmem:[#allocation2 + $0xc0] sm:$0xf]
    %v123 = vld [vmem:[#allocation2 + $0xc4] sm:$0xf]
    %v124 = vld [vmem:[#allocation2 + $0xc8] sm:$0xf]
    %v125 = vld [vmem:[#allocation2 + $0xcc] sm:$0xf]
    %v126 = vld [vmem:[#allocation2 + $0xd0] sm:$0xf]
    %v127 = vld [vmem:[#allocation2 + $0xd4] sm:$0xf]
    %v128 = vld [vmem:[#allocation2 + $0xd8] sm:$0xf]
    %v129 = vld [vmem:[#allocation2 + $0xdc] sm:$0xf]
    %v130 = vld [vmem:[#allocation2 + $0xe0] sm:$0xf]
    %v131 = vld [vmem:[#allocation2 + $0xe4] sm:$0xf]
    %v132 = vld [vmem:[#allocation2 + $0xe8] sm:$0xf]
    %v133 = vld [vmem:[#allocation2 + $0xec] sm:$0xf]
    %v134 = vld [vmem:[#allocation2 + $0xf0] sm:$0xf]
    %v135 = vld [vmem:[#allocation2 + $0xf4] sm:$0xf]
    %v136 = vld [vmem:[#allocation2 + $0xf8] sm:$0xf]
    %v137 = vld [vmem:[#allocation2 + $0xfc] sm:$0xf]
    %v138 = vld [vmem:[#allocation2 + $0x100] sm:$0xf]
    %v139 = vld [vmem:[#allocation2 + $0x104] sm:$0xf]
    %v140 = vld [vmem:[#allocation2 + $0x108] sm:$0xf]
    %v141 = vld [vmem:[#allocation2 + $0x10c] sm:$0xf]
    %v142 = vld [vmem:[#allocation2 + $0x110] sm:$0xf]
    %v143 = vld [vmem:[#allocation2 + $0x114] sm:$0xf]
    %v144 = vld [vmem:[#allocation2 + $0x118] sm:$0xf]
    %v145 = vld [vmem:[#allocation2 + $0x11c] sm:$0xf]
    %v146 = vld [vmem:[#allocation2 + $0x120] sm:$0xf]
    %v147 = vld [vmem:[#allocation2 + $0x124] sm:$0xf]
    %v148 = vld [vmem:[#allocation2 + $0x128] sm:$0xf]
    %v149 = vld [vmem:[#allocation2 + $0x12c] sm:$0xf]
    %v150 = vld [vmem:[#allocation2 + $0x130] sm:$0xf]
    %v151 = vld [vmem:[#allocation2 + $0x134] sm:$0xf]
    %v152 = vld [vmem:[#allocation2 + $0x138] sm:$0xf]
    %v153 = vld [vmem:[#allocation2 + $0x13c] sm:$0xf]
    %v154 = vld [vmem:[#allocation2 + $0x140] sm:$0xf]
    %v155 = vld [vmem:[#allocation2 + $0x144] sm:$0xf]
    %v156 = vld [vmem:[#allocation2 + $0x148] sm:$0xf]
    %v157 = vld [vmem:[#allocation2 + $0x14c] sm:$0xf]
    %v158 = vld [vmem:[#allocation2 + $0x150] sm:$0xf]
    %v159 = vld [vmem:[#allocation2 + $0x154] sm:$0xf]
    %v160 = vld [vmem:[#allocation2 + $0x158] sm:$0xf]
    %v161 = vld [vmem:[#allocation2 + $0x15c] sm:$0xf]
    %v162 = vld [vmem:[#allocation2 + $0x160] sm:$0xf]
    %v163 = vld [vmem:[#allocation2 + $0x164] sm:$0xf]
    %v164 = vld [vmem:[#allocation2 + $0x168] sm:$0xf]
    %v165 = vld [vmem:[#allocation2 + $0x16c] sm:$0xf]
    %v166 = vld [vmem:[#allocation2 + $0x170] sm:$0xf]
    %v167 = vld [vmem:[#allocation2 + $0x174] sm:$0xf]
    %v168 = vld [vmem:[#allocation2 + $0x178] sm:$0xf]
    %v169 = vld [vmem:[#allocation2 + $0x17c] sm:$0xf]
    %v170 = vld [vmem:[#allocation2 + $0x180] sm:$0xf]
    %v171 = vld [vmem:[#allocation2 + $0x184] sm:$0xf]
    %v172 = vld [vmem:[#allocation2 + $0x188] sm:$0xf]
    %v173 = vld [vmem:[#allocation2 + $0x18c] sm:$0xf]
    %v174 = vld [vmem:[#allocation2 + $0x190] sm:$0xf]
    %v175 = vld [vmem:[#allocation2 + $0x194] sm:$0xf]
    %v176 = vld [vmem:[#allocation2 + $0x198] sm:$0xf]
    %v177 = vld [vmem:[#allocation2 + $0x19c] sm:$0xf]
    %v178 = vld [vmem:[#allocation2 + $0x1a0] sm:$0xf]
    %v179 = vld [vmem:[#allocation2 + $0x1a4] sm:$0xf]
    %v180 = vld [vmem:[#allocation2 + $0x1a8] sm:$0xf]
    %v181 = vld [vmem:[#allocation2 + $0x1ac] sm:$0xf]
    %v182 = vld [vmem:[#allocation2 + $0x1b0] sm:$0xf]
    %v183 = vld [vmem:[#allocation2 + $0x1b4] sm:$0xf]
    %v184 = vld [vmem:[#allocation2 + $0x1b8] sm:$0xf]
    %v185 = vld [vmem:[#allocation2 + $0x1bc] sm:$0xf]
    %v186 = vld [vmem:[#allocation2 + $0x1c0] sm:$0xf]
    %v187 = vld [vmem:[#allocation2 + $0x1c4] sm:$0xf]
    %v188 = vld [vmem:[#allocation2 + $0x1c8] sm:$0xf]
    %v189 = vld [vmem:[#allocation2 + $0x1cc] sm:$0xf]
    %v190 = vld [vmem:[#allocation2 + $0x1d0] sm:$0xf]
    %v191 = vld [vmem:[#allocation2 + $0x1d4] sm:$0xf]
    %v192 = vld [vmem:[#allocation2 + $0x1d8] sm:$0xf]
    %v193 = vld [vmem:[#allocation2 + $0x1dc] sm:$0xf]
    %v194 = vld [vmem:[#allocation2 + $0x1e0] sm:$0xf]
    %v195 = vld [vmem:[#allocation2 + $0x1e4] sm:$0xf]
    %v196 = vld [vmem:[#allocation2 + $0x1e8] sm:$0xf]
    %v197 = vld [vmem:[#allocation2 + $0x1ec] sm:$0xf]
    %v198 = vld [vmem:[#allocation2 + $0x1f0] sm:$0xf]
    %v199 = vld [vmem:[#allocation2 + $0x1f4] sm:$0xf]
    %v200 = vld [vmem:[#allocation2 + $0x1f8] sm:$0xf]
    %v201 = vld [vmem:[#allocation2 + $0x1fc] sm:$0xf]
    %v202 = vld [vmem:[%s3] sm:$0x1]
    %v204 = vlaneseq
    %v205 = vshrl.u32 %v204, 7
    %v206 = vsub.s32 0, %v205
    %v207 = vrot.slane %v202, %v206
    %v217 = vunpack.c.l.b16 %v66
    %v218 = vunpack.c.h.b16 %v66
    %v219 = vunpack.c.l.b16 %v67
    %v220 = vunpack.c.h.b16 %v67
    %v221 = vunpack.c.l.b16 %v68
    %v222 = vunpack.c.h.b16 %v68
    %v223 = vunpack.c.l.b16 %v69
    %v224 = vunpack.c.h.b16 %v69
    %v225 = vunpack.c.l.b16 %v70
    %v226 = vunpack.c.h.b16 %v70
    %v227 = vunpack.c.l.b16 %v71
    %v228 = vunpack.c.h.b16 %v71
    %v229 = vunpack.c.l.b16 %v72
    %v230 = vunpack.c.h.b16 %v72
    %v231 = vunpack.c.l.b16 %v73
    %v232 = vunpack.c.h.b16 %v73
    %v233 = vpack.c.b16 %v225, %v217
    %v234 = vpack.c.b16 %v226, %v218
    %v235 = vpack.c.b16 %v227, %v219
    %v236 = vpack.c.b16 %v228, %v220
    %v237 = vpack.c.b16 %v229, %v221
    %v238 = vpack.c.b16 %v230, %v222
    %v239 = vpack.c.b16 %v231, %v223
    %v240 = vpack.c.b16 %v232, %v224
    %v377 = vunpack.c.l.b16 %v74
    %v378 = vunpack.c.l.b16 %v75
    %v379 = vunpack.c.l.b16 %v76
    %v380 = vunpack.c.l.b16 %v77
    %v381 = vunpack.c.l.b16 %v78
    %v382 = vunpack.c.l.b16 %v79
    %v383 = vunpack.c.l.b16 %v80
    %v384 = vunpack.c.l.b16 %v81
    %v385 = vunpack.c.l.b16 %v82
    %v386 = vunpack.c.l.b16 %v83
    %v387 = vunpack.c.l.b16 %v84
    %v388 = vunpack.c.l.b16 %v85
    %v389 = vunpack.c.l.b16 %v86
    %v390 = vunpack.c.l.b16 %v87
    %v391 = vunpack.c.l.b16 %v88
    %v392 = vunpack.c.l.b16 %v89
    %v393 = vunpack.c.l.b16 %v90
    %v394 = vunpack.c.l.b16 %v91
    %v395 = vunpack.c.l.b16 %v92
    %v396 = vunpack.c.l.b16 %v93
    %v397 = vunpack.c.l.b16 %v94
    %v398 = vunpack.c.l.b16 %v95
    %v399 = vunpack.c.l.b16 %v96
    %v400 = vunpack.c.l.b16 %v97
    %v401 = vunpack.c.l.b16 %v98
    %v402 = vunpack.c.l.b16 %v99
    %v403 = vunpack.c.l.b16 %v100
    %v404 = vunpack.c.l.b16 %v101
    %v405 = vunpack.c.l.b16 %v102
    %v406 = vunpack.c.l.b16 %v103
    %v407 = vunpack.c.l.b16 %v104
    %v408 = vunpack.c.l.b16 %v105
    %v409 = vunpack.c.l.b16 %v106
    %v410 = vunpack.c.l.b16 %v107
    %v411 = vunpack.c.l.b16 %v108
    %v412 = vunpack.c.l.b16 %v109
    %v413 = vunpack.c.l.b16 %v110
    %v414 = vunpack.c.l.b16 %v111
    %v415 = vunpack.c.l.b16 %v112
    %v416 = vunpack.c.l.b16 %v113
    %v417 = vunpack.c.l.b16 %v114
    %v418 = vunpack.c.l.b16 %v115
    %v419 = vunpack.c.l.b16 %v116
    %v420 = vunpack.c.l.b16 %v117
    %v421 = vunpack.c.l.b16 %v118
    %v422 = vunpack.c.l.b16 %v119
    %v423 = vunpack.c.l.b16 %v120
    %v424 = vunpack.c.l.b16 %v121
    %v425 = vunpack.c.l.b16 %v122
    %v426 = vunpack.c.l.b16 %v123
    %v427 = vunpack.c.l.b16 %v124
    %v428 = vunpack.c.l.b16 %v125
    %v429 = vunpack.c.l.b16 %v126
    %v430 = vunpack.c.l.b16 %v127
    %v431 = vunpack.c.l.b16 %v128
    %v432 = vunpack.c.l.b16 %v129
    %v433 = vunpack.c.l.b16 %v130
    %v434 = vunpack.c.l.b16 %v131
    %v435 = vunpack.c.l.b16 %v132
    %v436 = vunpack.c.l.b16 %v133
    %v437 = vunpack.c.l.b16 %v134
    %v438 = vunpack.c.l.b16 %v135
    %v439 = vunpack.c.l.b16 %v136
    %v440 = vunpack.c.l.b16 %v137
    %v441 = vunpack.c.l.b16 %v138
    %v442 = vunpack.c.l.b16 %v139
    %v443 = vunpack.c.l.b16 %v140
    %v444 = vunpack.c.l.b16 %v141
    %v445 = vunpack.c.l.b16 %v142
    %v446 = vunpack.c.l.b16 %v143
    %v447 = vunpack.c.l.b16 %v144
    %v448 = vunpack.c.l.b16 %v145
    %v449 = vunpack.c.l.b16 %v146
    %v450 = vunpack.c.l.b16 %v147
    %v451 = vunpack.c.l.b16 %v148
    %v452 = vunpack.c.l.b16 %v149
    %v453 = vunpack.c.l.b16 %v150
    %v454 = vunpack.c.l.b16 %v151
    %v455 = vunpack.c.l.b16 %v152
    %v456 = vunpack.c.l.b16 %v153
    %v457 = vunpack.c.l.b16 %v154
    %v458 = vunpack.c.l.b16 %v155
    %v459 = vunpack.c.l.b16 %v156
    %v460 = vunpack.c.l.b16 %v157
    %v461 = vunpack.c.l.b16 %v158
    %v462 = vunpack.c.l.b16 %v159
    %v463 = vunpack.c.l.b16 %v160
    %v464 = vunpack.c.l.b16 %v161
    %v465 = vunpack.c.l.b16 %v162
    %v466 = vunpack.c.l.b16 %v163
    %v467 = vunpack.c.l.b16 %v164
    %v468 = vunpack.c.l.b16 %v165
    %v469 = vunpack.c.l.b16 %v166
    %v470 = vunpack.c.l.b16 %v167
    %v471 = vunpack.c.l.b16 %v168
    %v472 = vunpack.c.l.b16 %v169
    %v473 = vunpack.c.l.b16 %v170
    %v474 = vunpack.c.l.b16 %v171
    %v475 = vunpack.c.l.b16 %v172
    %v476 = vunpack.c.l.b16 %v173
    %v477 = vunpack.c.l.b16 %v174
    %v478 = vunpack.c.l.b16 %v175
    %v479 = vunpack.c.l.b16 %v176
    %v480 = vunpack.c.l.b16 %v177
    %v481 = vunpack.c.l.b16 %v178
    %v482 = vunpack.c.l.b16 %v179
    %v483 = vunpack.c.l.b16 %v180
    %v484 = vunpack.c.l.b16 %v181
    %v485 = vunpack.c.l.b16 %v182
    %v486 = vunpack.c.l.b16 %v183
    %v487 = vunpack.c.l.b16 %v184
    %v488 = vunpack.c.l.b16 %v185
    %v489 = vunpack.c.l.b16 %v186
    %v490 = vunpack.c.l.b16 %v187
    %v491 = vunpack.c.l.b16 %v188
    %v492 = vunpack.c.l.b16 %v189
    %v493 = vunpack.c.l.b16 %v190
    %v494 = vunpack.c.l.b16 %v191
    %v495 = vunpack.c.l.b16 %v192
    %v496 = vunpack.c.l.b16 %v193
    %v497 = vunpack.c.l.b16 %v194
    %v498 = vunpack.c.l.b16 %v195
    %v499 = vunpack.c.l.b16 %v196
    %v500 = vunpack.c.l.b16 %v197
    %v501 = vunpack.c.l.b16 %v198
    %v502 = vunpack.c.l.b16 %v199
    %v503 = vunpack.c.l.b16 %v200
    %v504 = vunpack.c.l.b16 %v201
    %v505 = vpack.c.b16 %v378, %v377
    %v506 = vpack.c.b16 %v380, %v379
    %v507 = vpack.c.b16 %v382, %v381
    %v508 = vpack.c.b16 %v384, %v383
    %v509 = vpack.c.b16 %v386, %v385
    %v510 = vpack.c.b16 %v388, %v387
    %v511 = vpack.c.b16 %v390, %v389
    %v512 = vpack.c.b16 %v392, %v391
    %v513 = vpack.c.b16 %v394, %v393
    %v514 = vpack.c.b16 %v396, %v395
    %v515 = vpack.c.b16 %v398, %v397
    %v516 = vpack.c.b16 %v400, %v399
    %v517 = vpack.c.b16 %v402, %v401
    %v518 = vpack.c.b16 %v404, %v403
    %v519 = vpack.c.b16 %v406, %v405
    %v520 = vpack.c.b16 %v408, %v407
    %v521 = vpack.c.b16 %v410, %v409
    %v522 = vpack.c.b16 %v412, %v411
    %v523 = vpack.c.b16 %v414, %v413
    %v524 = vpack.c.b16 %v416, %v415
    %v525 = vpack.c.b16 %v418, %v417
    %v526 = vpack.c.b16 %v420, %v419
    %v527 = vpack.c.b16 %v422, %v421
    %v528 = vpack.c.b16 %v424, %v423
    %v529 = vpack.c.b16 %v426, %v425
    %v530 = vpack.c.b16 %v428, %v427
    %v531 = vpack.c.b16 %v430, %v429
    %v532 = vpack.c.b16 %v432, %v431
    %v533 = vpack.c.b16 %v434, %v433
    %v534 = vpack.c.b16 %v436, %v435
    %v535 = vpack.c.b16 %v438, %v437
    %v536 = vpack.c.b16 %v440, %v439
    %v537 = vpack.c.b16 %v442, %v441
    %v538 = vpack.c.b16 %v444, %v443
    %v539 = vpack.c.b16 %v446, %v445
    %v540 = vpack.c.b16 %v448, %v447
    %v541 = vpack.c.b16 %v450, %v449
    %v542 = vpack.c.b16 %v452, %v451
    %v543 = vpack.c.b16 %v454, %v453
    %v544 = vpack.c.b16 %v456, %v455
    %v545 = vpack.c.b16 %v458, %v457
    %v546 = vpack.c.b16 %v460, %v459
    %v547 = vpack.c.b16 %v462, %v461
    %v548 = vpack.c.b16 %v464, %v463
    %v549 = vpack.c.b16 %v466, %v465
    %v550 = vpack.c.b16 %v468, %v467
    %v551 = vpack.c.b16 %v470, %v469
    %v552 = vpack.c.b16 %v472, %v471
    %v553 = vpack.c.b16 %v474, %v473
    %v554 = vpack.c.b16 %v476, %v475
    %v555 = vpack.c.b16 %v478, %v477
    %v556 = vpack.c.b16 %v480, %v479
    %v557 = vpack.c.b16 %v482, %v481
    %v558 = vpack.c.b16 %v484, %v483
    %v559 = vpack.c.b16 %v486, %v485
    %v560 = vpack.c.b16 %v488, %v487
    %v561 = vpack.c.b16 %v490, %v489
    %v562 = vpack.c.b16 %v492, %v491
    %v563 = vpack.c.b16 %v494, %v493
    %v564 = vpack.c.b16 %v496, %v495
    %v565 = vpack.c.b16 %v498, %v497
    %v566 = vpack.c.b16 %v500, %v499
    %v567 = vpack.c.b16 %v502, %v501
    %v568 = vpack.c.b16 %v504, %v503
    %633 = vmatprep.subr.bf16.mxu0 0
    %634 = vmatpush1.bf16.msra.mxu0 %v512
    %635 = vmatprep.subr.bf16.mxu0 0
    %636 = vmatpush1.bf16.msra.mxu0 %v511
    %637 = vmatprep.subr.bf16.mxu0 0
    %638 = vmatpush1.bf16.msra.mxu0 %v510
    %639 = vmatprep.subr.bf16.mxu0 0
    %640 = vmatpush1.bf16.msra.mxu0 %v509
    %641 = vmatprep.subr.bf16.mxu0 0
    %642 = vmatpush1.bf16.msra.mxu0 %v508
    %643 = vmatprep.subr.bf16.mxu0 0
    %644 = vmatpush1.bf16.msra.mxu0 %v507
    %645 = vmatprep.subr.bf16.mxu0 0
    %646 = vmatpush1.bf16.msra.mxu0 %v506
    %647 = vmatprep.subr.bf16.mxu0 0
    %648 = vmatpush1.bf16.msra.mxu0 %v505
    %649 = vmatprep.subr.bf16.mxu0 0
    %650 = vmatpush2.bf16.msra.mxu0 %v520
    %651 = vmatprep.subr.bf16.mxu0 0
    %652 = vmatpush2.bf16.msra.mxu0 %v519
    %653 = vmatprep.subr.bf16.mxu0 0
    %654 = vmatpush2.bf16.msra.mxu0 %v518
    %655 = vmatprep.subr.bf16.mxu0 0
    %656 = vmatpush2.bf16.msra.mxu0 %v517
    %657 = vmatprep.subr.bf16.mxu0 0
    %658 = vmatpush2.bf16.msra.mxu0 %v516
    %659 = vmatprep.subr.bf16.mxu0 0
    %660 = vmatpush2.bf16.msra.mxu0 %v515
    %661 = vmatprep.subr.bf16.mxu0 0
    %662 = vmatpush2.bf16.msra.mxu0 %v514
    %663 = vmatprep.subr.bf16.mxu0 0
    %664 = vmatpush2.bf16.msra.mxu0 %v513
    %665 = vmatprep.mubr.bf16.mxu0 %v234
    %666 = vmatmul.mubr.bf16.gmra.mxu0 %v233
    %v667 = vpop.f32.mrf.mxu0
    %v668 = vadd.f32 %v207, %v667
    %v669 = vpop.f32.mrf.mxu0
    %v670 = vpop.f32.mrf.mxu0
    %v671 = vadd.f32 %v207, %v670
    %v672 = vpop.f32.mrf.mxu0
    %673 = vdwg.mxu0
    %674 = vmatprep.subr.bf16.mxu0 0
    %675 = vmatpush1.bf16.msra.mxu0 %v528
    %676 = vmatprep.subr.bf16.mxu0 0
    %677 = vmatpush1.bf16.msra.mxu0 %v527
    %678 = vmatprep.subr.bf16.mxu0 0
    %679 = vmatpush1.bf16.msra.mxu0 %v526
    %680 = vmatprep.subr.bf16.mxu0 0
    %681 = vmatpush1.bf16.msra.mxu0 %v525
    %682 = vmatprep.subr.bf16.mxu0 0
    %683 = vmatpush1.bf16.msra.mxu0 %v524
    %684 = vmatprep.subr.bf16.mxu0 0
    %685 = vmatpush1.bf16.msra.mxu0 %v523
    %686 = vmatprep.subr.bf16.mxu0 0
    %687 = vmatpush1.bf16.msra.mxu0 %v522
    %688 = vmatprep.subr.bf16.mxu0 0
    %689 = vmatpush1.bf16.msra.mxu0 %v521
    %690 = vmatprep.subr.bf16.mxu0 0
    %691 = vmatpush2.bf16.msra.mxu0 %v536
    %692 = vmatprep.subr.bf16.mxu0 0
    %693 = vmatpush2.bf16.msra.mxu0 %v535
    %694 = vmatprep.subr.bf16.mxu0 0
    %695 = vmatpush2.bf16.msra.mxu0 %v534
    %696 = vmatprep.subr.bf16.mxu0 0
    %697 = vmatpush2.bf16.msra.mxu0 %v533
    %698 = vmatprep.subr.bf16.mxu0 0
    %699 = vmatpush2.bf16.msra.mxu0 %v532
    %700 = vmatprep.subr.bf16.mxu0 0
    %701 = vmatpush2.bf16.msra.mxu0 %v531
    %702 = vmatprep.subr.bf16.mxu0 0
    %703 = vmatpush2.bf16.msra.mxu0 %v530
    %704 = vmatprep.subr.bf16.mxu0 0
    %705 = vmatpush2.bf16.msra.mxu0 %v529
    %706 = vmatprep.mubr.bf16.mxu0 %v236
    %707 = vmatmul.mubr.bf16.gmra.mxu0 %v235
    %v708 = vpop.f32.mrf.mxu0
    %v709 = vadd.f32 %v668, %v708
    %v710 = vpop.f32.mrf.mxu0
    %v711 = vpop.f32.mrf.mxu0
    %v712 = vadd.f32 %v671, %v711
    %v713 = vpop.f32.mrf.mxu0
    %714 = vdwg.mxu0
    %715 = vmatprep.subr.bf16.mxu0 0
    %716 = vmatpush1.bf16.msra.mxu0 %v544
    %717 = vmatprep.subr.bf16.mxu0 0
    %718 = vmatpush1.bf16.msra.mxu0 %v543
    %719 = vmatprep.subr.bf16.mxu0 0
    %720 = vmatpush1.bf16.msra.mxu0 %v542
    %721 = vmatprep.subr.bf16.mxu0 0
    %722 = vmatpush1.bf16.msra.mxu0 %v541
    %723 = vmatprep.subr.bf16.mxu0 0
    %724 = vmatpush1.bf16.msra.mxu0 %v540
    %725 = vmatprep.subr.bf16.mxu0 0
    %726 = vmatpush1.bf16.msra.mxu0 %v539
    %727 = vmatprep.subr.bf16.mxu0 0
    %728 = vmatpush1.bf16.msra.mxu0 %v538
    %729 = vmatprep.subr.bf16.mxu0 0
    %730 = vmatpush1.bf16.msra.mxu0 %v537
    %731 = vmatprep.subr.bf16.mxu0 0
    %732 = vmatpush2.bf16.msra.mxu0 %v552
    %733 = vmatprep.subr.bf16.mxu0 0
    %734 = vmatpush2.bf16.msra.mxu0 %v551
    %735 = vmatprep.subr.bf16.mxu0 0
    %736 = vmatpush2.bf16.msra.mxu0 %v550
    %737 = vmatprep.subr.bf16.mxu0 0
    %738 = vmatpush2.bf16.msra.mxu0 %v549
    %739 = vmatprep.subr.bf16.mxu0 0
    %740 = vmatpush2.bf16.msra.mxu0 %v548
    %741 = vmatprep.subr.bf16.mxu0 0
    %742 = vmatpush2.bf16.msra.mxu0 %v547
    %743 = vmatprep.subr.bf16.mxu0 0
    %744 = vmatpush2.bf16.msra.mxu0 %v546
    %745 = vmatprep.subr.bf16.mxu0 0
    %746 = vmatpush2.bf16.msra.mxu0 %v545
    %747 = vmatprep.mubr.bf16.mxu0 %v238
    %748 = vmatmul.mubr.bf16.gmra.mxu0 %v237
    %v749 = vpop.f32.mrf.mxu0
    %v750 = vadd.f32 %v709, %v749
    %v751 = vpop.f32.mrf.mxu0
    %v752 = vpop.f32.mrf.mxu0
    %v753 = vadd.f32 %v712, %v752
    %v754 = vpop.f32.mrf.mxu0
    %755 = vdwg.mxu0
    %756 = vmatprep.subr.bf16.mxu0 0
    %757 = vmatpush1.bf16.msra.mxu0 %v560
    %758 = vmatprep.subr.bf16.mxu0 0
    %759 = vmatpush1.bf16.msra.mxu0 %v559
    %760 = vmatprep.subr.bf16.mxu0 0
    %761 = vmatpush1.bf16.msra.mxu0 %v558
    %762 = vmatprep.subr.bf16.mxu0 0
    %763 = vmatpush1.bf16.msra.mxu0 %v557
    %764 = vmatprep.subr.bf16.mxu0 0
    %765 = vmatpush1.bf16.msra.mxu0 %v556
    %766 = vmatprep.subr.bf16.mxu0 0
    %767 = vmatpush1.bf16.msra.mxu0 %v555
    %768 = vmatprep.subr.bf16.mxu0 0
    %769 = vmatpush1.bf16.msra.mxu0 %v554
    %770 = vmatprep.subr.bf16.mxu0 0
    %771 = vmatpush1.bf16.msra.mxu0 %v553
    %772 = vmatprep.subr.bf16.mxu0 0
    %773 = vmatpush2.bf16.msra.mxu0 %v568
    %774 = vmatprep.subr.bf16.mxu0 0
    %775 = vmatpush2.bf16.msra.mxu0 %v567
    %776 = vmatprep.subr.bf16.mxu0 0
    %777 = vmatpush2.bf16.msra.mxu0 %v566
    %778 = vmatprep.subr.bf16.mxu0 0
    %779 = vmatpush2.bf16.msra.mxu0 %v565
    %780 = vmatprep.subr.bf16.mxu0 0
    %781 = vmatpush2.bf16.msra.mxu0 %v564
    %782 = vmatprep.subr.bf16.mxu0 0
    %783 = vmatpush2.bf16.msra.mxu0 %v563
    %784 = vmatprep.subr.bf16.mxu0 0
    %785 = vmatpush2.bf16.msra.mxu0 %v562
    %786 = vmatprep.subr.bf16.mxu0 0
    %787 = vmatpush2.bf16.msra.mxu0 %v561
    %788 = vmatprep.mubr.bf16.mxu0 %v240
    %789 = vmatmul.mubr.bf16.gmra.mxu0 %v239
    %v790 = vpop.f32.mrf.mxu0
    %v791 = vadd.f32 %v750, %v790
    %v792 = vpop.f32.mrf.mxu0
    %v793 = vpop.f32.mrf.mxu0
    %v794 = vadd.f32 %v753, %v793
    %v795 = vpop.f32.mrf.mxu0
    %796 = vdwg.mxu0
    %v797 = vmax.f32 %v791, 0.0
    %v798 = vmax.f32 %v794, 0.0
    %v799 = vpack.c.bf16 %v798, %v797
    %v800 = vld [vmem:[%s4] sm:$0xf]
    %v801 = vld [vmem:[%s4 + $0x4] sm:$0xf]
    %v802 = vld [vmem:[%s4 + $0x8] sm:$0xf]
    %v803 = vld [vmem:[%s4 + $0xc] sm:$0xf]
    %v804 = vld [vmem:[%s4 + $0x10] sm:$0xf]
    %v805 = vld [vmem:[%s4 + $0x14] sm:$0xf]
    %v806 = vld [vmem:[%s4 + $0x18] sm:$0xf]
    %v807 = vld [vmem:[%s4 + $0x1c] sm:$0xf]
    %v808 = vld [vmem:[%s4 + $0x20] sm:$0xf]
    %v809 = vld [vmem:[%s4 + $0x24] sm:$0xf]
    %v810 = vld [vmem:[%s4 + $0x28] sm:$0xf]
    %v811 = vld [vmem:[%s4 + $0x2c] sm:$0xf]
    %v812 = vld [vmem:[%s4 + $0x30] sm:$0xf]
    %v813 = vld [vmem:[%s4 + $0x34] sm:$0xf]
    %v814 = vld [vmem:[%s4 + $0x38] sm:$0xf]
    %v815 = vld [vmem:[%s4 + $0x3c] sm:$0xf]
    %v816 = vld [vmem:[%s5] sm:$0x1]
    %v818 = vlaneseq
    %v819 = vshrl.u32 %v818, 7
    %v820 = vsub.s32 0, %v819
    %v821 = vrot.slane %v816, %v820
    %v839 = vunpack.c.l.b16 %v800
    %v840 = vunpack.c.l.b16 %v801
    %v841 = vunpack.c.l.b16 %v802
    %v842 = vunpack.c.l.b16 %v803
    %v843 = vunpack.c.l.b16 %v804
    %v844 = vunpack.c.l.b16 %v805
    %v845 = vunpack.c.l.b16 %v806
    %v846 = vunpack.c.l.b16 %v807
    %v847 = vunpack.c.l.b16 %v808
    %v848 = vunpack.c.l.b16 %v809
    %v849 = vunpack.c.l.b16 %v810
    %v850 = vunpack.c.l.b16 %v811
    %v851 = vunpack.c.l.b16 %v812
    %v852 = vunpack.c.l.b16 %v813
    %v853 = vunpack.c.l.b16 %v814
    %v854 = vunpack.c.l.b16 %v815
    %v855 = vpack.c.b16 %v840, %v839
    %v856 = vpack.c.b16 %v842, %v841
    %v857 = vpack.c.b16 %v844, %v843
    %v858 = vpack.c.b16 %v846, %v845
    %v859 = vpack.c.b16 %v848, %v847
    %v860 = vpack.c.b16 %v850, %v849
    %v861 = vpack.c.b16 %v852, %v851
    %v862 = vpack.c.b16 %v854, %v853
    %871 = vmatprep.subr.bf16.mxu0 0
    %872 = vmatpush1.bf16.msra.mxu0 %v862
    %873 = vmatprep.subr.bf16.mxu0 0
    %874 = vmatpush1.bf16.msra.mxu0 %v861
    %875 = vmatprep.subr.bf16.mxu0 0
    %876 = vmatpush1.bf16.msra.mxu0 %v860
    %877 = vmatprep.subr.bf16.mxu0 0
    %878 = vmatpush1.bf16.msra.mxu0 %v859
    %879 = vmatprep.subr.bf16.mxu0 0
    %880 = vmatpush1.bf16.msra.mxu0 %v858
    %881 = vmatprep.subr.bf16.mxu0 0
    %882 = vmatpush1.bf16.msra.mxu0 %v857
    %883 = vmatprep.subr.bf16.mxu0 0
    %884 = vmatpush1.bf16.msra.mxu0 %v856
    %885 = vmatprep.subr.bf16.mxu0 0
    %886 = vmatpush1.bf16.msra.mxu0 %v855
    %887 = vmatprep.subr.bf16.mxu0 0
    %888 = vmatpush2.bf16.msra.mxu0 0
    %889 = vmatprep.subr.bf16.mxu0 0
    %890 = vmatpush2.bf16.msra.mxu0 0
    %891 = vmatprep.subr.bf16.mxu0 0
    %892 = vmatpush2.bf16.msra.mxu0 0
    %893 = vmatprep.subr.bf16.mxu0 0
    %894 = vmatpush2.bf16.msra.mxu0 0
    %895 = vmatprep.subr.bf16.mxu0 0
    %896 = vmatpush2.bf16.msra.mxu0 0
    %897 = vmatprep.subr.bf16.mxu0 0
    %898 = vmatpush2.bf16.msra.mxu0 0
    %899 = vmatprep.subr.bf16.mxu0 0
    %900 = vmatpush2.bf16.msra.mxu0 0
    %901 = vmatprep.subr.bf16.mxu0 0
    %902 = vmatpush2.bf16.msra.mxu0 0
    %903 = vmatprep.mubr.bf16.mxu0 0
    %904 = vmatmul.mubr.bf16.gmra.mxu0 %v799
    %v905 = vpop.f32.mrf.mxu0
    %v906 = vadd.f32 %v821, %v905
    %v907 = vpop.f32.mrf.mxu0
    %v908 = vpop.f32.mrf.mxu0
    %v909 = vadd.f32 %v821, %v908
    %v910 = vpop.f32.mrf.mxu0
    %911 = vdwg.mxu0
    %912 = vst [vmem:[%s11] sm:$0xff] %v906
    %913 = vst [vmem:[%s11 + $0x8] sm:$0xff] %v909
    %914 = vrot.lane.b32.xlu0 %v906, 112
    %v915 = vpop.permute.xlu0 %914
    %916 = vrot.lane.b32.xlu0 %v909, 112
    %v917 = vpop.permute.xlu0 %916
    %v918 = vmul.f32 %v915, 0.5
    %v919 = vmul.f32 %v917, 0.5
    %v920 = vmul.f32 %v918, 1.442695
    %v921 = vpow.pop %v920
    %v922 = vmul.f32 %v919, 1.442695
    %v923 = vpow.pop %v922
    %v924 = vld [vmem:[%s1] sm:$0xff]
    %v925 = vld [vmem:[%s1 + $0x8] sm:$0xff]
    %v926 = vmul.f32 %v921, %v924
    %v927 = vmul.f32 %v923, %v925
    %v928 = vadd.f32 %v906, %v926
    %v929 = vadd.f32 %v909, %v927
    %v930 = vpack.c.bf16 %v929, %v928
    %v931 = vld [vmem:[%s6] sm:$0xf]
    %v932 = vld [vmem:[%s6 + $0x4] sm:$0xf]
    %v933 = vld [vmem:[%s6 + $0x8] sm:$0xf]
    %v934 = vld [vmem:[%s6 + $0xc] sm:$0xf]
    %v935 = vld [vmem:[%s6 + $0x10] sm:$0xf]
    %v936 = vld [vmem:[%s6 + $0x14] sm:$0xf]
    %v937 = vld [vmem:[%s6 + $0x18] sm:$0xf]
    %v938 = vld [vmem:[%s6 + $0x1c] sm:$0xf]
    %v939 = vld [vmem:[%s6 + $0x20] sm:$0xf]
    %v940 = vld [vmem:[%s6 + $0x24] sm:$0xf]
    %v941 = vld [vmem:[%s6 + $0x28] sm:$0xf]
    %v942 = vld [vmem:[%s6 + $0x2c] sm:$0xf]
    %v943 = vld [vmem:[%s6 + $0x30] sm:$0xf]
    %v944 = vld [vmem:[%s6 + $0x34] sm:$0xf]
    %v945 = vld [vmem:[%s6 + $0x38] sm:$0xf]
    %v946 = vld [vmem:[%s6 + $0x3c] sm:$0xf]
    %v947 = vld [vmem:[%s7] sm:$0x1]
    %v949 = vlaneseq
    %v950 = vshrl.u32 %v949, 7
    %v951 = vsub.s32 0, %v950
    %v952 = vrot.slane %v947, %v951
    %v970 = vunpack.c.l.b16 %v931
    %v971 = vunpack.c.l.b16 %v932
    %v972 = vunpack.c.l.b16 %v933
    %v973 = vunpack.c.l.b16 %v934
    %v974 = vunpack.c.l.b16 %v935
    %v975 = vunpack.c.l.b16 %v936
    %v976 = vunpack.c.l.b16 %v937
    %v977 = vunpack.c.l.b16 %v938
    %v978 = vunpack.c.l.b16 %v939
    %v979 = vunpack.c.l.b16 %v940
    %v980 = vunpack.c.l.b16 %v941
    %v981 = vunpack.c.l.b16 %v942
    %v982 = vunpack.c.l.b16 %v943
    %v983 = vunpack.c.l.b16 %v944
    %v984 = vunpack.c.l.b16 %v945
    %v985 = vunpack.c.l.b16 %v946
    %v986 = vpack.c.b16 %v971, %v970
    %v987 = vpack.c.b16 %v973, %v972
    %v988 = vpack.c.b16 %v975, %v974
    %v989 = vpack.c.b16 %v977, %v976
    %v990 = vpack.c.b16 %v979, %v978
    %v991 = vpack.c.b16 %v981, %v980
    %v992 = vpack.c.b16 %v983, %v982
    %v993 = vpack.c.b16 %v985, %v984
    %1002 = vmatprep.subr.bf16.mxu0 0
    %1003 = vmatpush1.bf16.msra.mxu0 %v993
    %1004 = vmatprep.subr.bf16.mxu0 0
    %1005 = vmatpush1.bf16.msra.mxu0 %v992
    %1006 = vmatprep.subr.bf16.mxu0 0
    %1007 = vmatpush1.bf16.msra.mxu0 %v991
    %1008 = vmatprep.subr.bf16.mxu0 0
    %1009 = vmatpush1.bf16.msra.mxu0 %v990
    %1010 = vmatprep.subr.bf16.mxu0 0
    %1011 = vmatpush1.bf16.msra.mxu0 %v989
    %1012 = vmatprep.subr.bf16.mxu0 0
    %1013 = vmatpush1.bf16.msra.mxu0 %v988
    %1014 = vmatprep.subr.bf16.mxu0 0
    %1015 = vmatpush1.bf16.msra.mxu0 %v987
    %1016 = vmatprep.subr.bf16.mxu0 0
    %1017 = vmatpush1.bf16.msra.mxu0 %v986
    %1018 = vmatprep.subr.bf16.mxu0 0
    %1019 = vmatpush2.bf16.msra.mxu0 0
    %1020 = vmatprep.subr.bf16.mxu0 0
    %1021 = vmatpush2.bf16.msra.mxu0 0
    %1022 = vmatprep.subr.bf16.mxu0 0
    %1023 = vmatpush2.bf16.msra.mxu0 0
    %1024 = vmatprep.subr.bf16.mxu0 0
    %1025 = vmatpush2.bf16.msra.mxu0 0
    %1026 = vmatprep.subr.bf16.mxu0 0
    %1027 = vmatpush2.bf16.msra.mxu0 0
    %1028 = vmatprep.subr.bf16.mxu0 0
    %1029 = vmatpush2.bf16.msra.mxu0 0
    %1030 = vmatprep.subr.bf16.mxu0 0
    %1031 = vmatpush2.bf16.msra.mxu0 0
    %1032 = vmatprep.subr.bf16.mxu0 0
    %1033 = vmatpush2.bf16.msra.mxu0 0
    %1034 = vmatprep.mubr.bf16.mxu0 0
    %1035 = vmatmul.mubr.bf16.gmra.mxu0 %v930
    %v1036 = vpop.f32.mrf.mxu0
    %v1037 = vadd.f32 %v952, %v1036
    %v1038 = vpop.f32.mrf.mxu0
    %v1039 = vpop.f32.mrf.mxu0
    %v1040 = vadd.f32 %v952, %v1039
    %v1041 = vpop.f32.mrf.mxu0
    %1042 = vdwg.mxu0
    %v1043 = vmax.f32 %v1037, 0.0
    %v1044 = vmax.f32 %v1040, 0.0
    %v1045 = vpack.c.bf16 %v1044, %v1043
    %v1046 = vld [vmem:[#allocation4] sm:$0xff]
    %v1047 = vld [vmem:[#allocation4 + $0x8] sm:$0xff]
    %v1048 = vld [vmem:[#allocation4 + $0x10] sm:$0xff]
    %v1049 = vld [vmem:[#allocation4 + $0x18] sm:$0xff]
    %v1050 = vld [vmem:[#allocation4 + $0x20] sm:$0xff]
    %v1051 = vld [vmem:[#allocation4 + $0x28] sm:$0xff]
    %v1052 = vld [vmem:[#allocation4 + $0x30] sm:$0xff]
    %v1053 = vld [vmem:[#allocation4 + $0x38] sm:$0xff]
    %v1054 = vld [vmem:[#allocation4 + $0x40] sm:$0xff]
    %v1055 = vld [vmem:[#allocation4 + $0x48] sm:$0xff]
    %v1056 = vld [vmem:[#allocation4 + $0x50] sm:$0xff]
    %v1057 = vld [vmem:[#allocation4 + $0x58] sm:$0xff]
    %v1058 = vld [vmem:[#allocation4 + $0x60] sm:$0xff]
    %v1059 = vld [vmem:[#allocation4 + $0x68] sm:$0xff]
    %v1060 = vld [vmem:[#allocation4 + $0x70] sm:$0xff]
    %v1061 = vld [vmem:[#allocation4 + $0x78] sm:$0xff]
    %v1062 = vld [vmem:[#allocation4 + $0x80] sm:$0xff]
    %v1063 = vld [vmem:[#allocation4 + $0x88] sm:$0xff]
    %v1064 = vld [vmem:[#allocation4 + $0x90] sm:$0xff]
    %v1065 = vld [vmem:[#allocation4 + $0x98] sm:$0xff]
    %v1066 = vld [vmem:[#allocation4 + $0xa0] sm:$0xff]
    %v1067 = vld [vmem:[#allocation4 + $0xa8] sm:$0xff]
    %v1068 = vld [vmem:[#allocation4 + $0xb0] sm:$0xff]
    %v1069 = vld [vmem:[#allocation4 + $0xb8] sm:$0xff]
    %v1070 = vld [vmem:[#allocation4 + $0xc0] sm:$0xff]
    %v1071 = vld [vmem:[#allocation4 + $0xc8] sm:$0xff]
    %v1072 = vld [vmem:[#allocation4 + $0xd0] sm:$0xff]
    %v1073 = vld [vmem:[#allocation4 + $0xd8] sm:$0xff]
    %v1074 = vld [vmem:[#allocation4 + $0xe0] sm:$0xff]
    %v1075 = vld [vmem:[#allocation4 + $0xe8] sm:$0xff]
    %v1076 = vld [vmem:[#allocation4 + $0xf0] sm:$0xff]
    %v1077 = vld [vmem:[#allocation4 + $0xf8] sm:$0xff]
    %v1078 = vld [vmem:[#allocation4 + $0x100] sm:$0xff]
    %v1079 = vld [vmem:[#allocation4 + $0x108] sm:$0xff]
    %v1080 = vld [vmem:[#allocation4 + $0x110] sm:$0xff]
    %v1081 = vld [vmem:[#allocation4 + $0x118] sm:$0xff]
    %v1082 = vld [vmem:[#allocation4 + $0x120] sm:$0xff]
    %v1083 = vld [vmem:[#allocation4 + $0x128] sm:$0xff]
    %v1084 = vld [vmem:[#allocation4 + $0x130] sm:$0xff]
    %v1085 = vld [vmem:[#allocation4 + $0x138] sm:$0xff]
    %v1086 = vld [vmem:[#allocation4 + $0x140] sm:$0xff]
    %v1087 = vld [vmem:[#allocation4 + $0x148] sm:$0xff]
    %v1088 = vld [vmem:[#allocation4 + $0x150] sm:$0xff]
    %v1089 = vld [vmem:[#allocation4 + $0x158] sm:$0xff]
    %v1090 = vld [vmem:[#allocation4 + $0x160] sm:$0xff]
    %v1091 = vld [vmem:[#allocation4 + $0x168] sm:$0xff]
    %v1092 = vld [vmem:[#allocation4 + $0x170] sm:$0xff]
    %v1093 = vld [vmem:[#allocation4 + $0x178] sm:$0xff]
    %v1094 = vld [vmem:[#allocation4 + $0x180] sm:$0xff]
    %v1095 = vld [vmem:[#allocation4 + $0x188] sm:$0xff]
    %v1096 = vld [vmem:[#allocation4 + $0x190] sm:$0xff]
    %v1097 = vld [vmem:[#allocation4 + $0x198] sm:$0xff]
    %v1098 = vld [vmem:[#allocation4 + $0x1a0] sm:$0xff]
    %v1099 = vld [vmem:[#allocation4 + $0x1a8] sm:$0xff]
    %v1100 = vld [vmem:[#allocation4 + $0x1b0] sm:$0xff]
    %v1101 = vld [vmem:[#allocation4 + $0x1b8] sm:$0xff]
    %v1102 = vld [vmem:[#allocation4 + $0x1c0] sm:$0xff]
    %v1103 = vld [vmem:[#allocation4 + $0x1c8] sm:$0xff]
    %v1104 = vld [vmem:[#allocation4 + $0x1d0] sm:$0xff]
    %v1105 = vld [vmem:[#allocation4 + $0x1d8] sm:$0xff]
    %v1106 = vld [vmem:[#allocation4 + $0x1e0] sm:$0xff]
    %v1107 = vld [vmem:[#allocation4 + $0x1e8] sm:$0xff]
    %v1108 = vld [vmem:[#allocation4 + $0x1f0] sm:$0xff]
    %v1109 = vld [vmem:[#allocation4 + $0x1f8] sm:$0xff]
    %v1110 = vld [vmem:[%s9] sm:$0xff]
    %v1112 = vlaneseq
    %v1113 = vshrl.u32 %v1112, 7
    %v1114 = vsub.s32 0, %v1113
    %v1115 = vrot.slane %v1110, %v1114
    %v1116 = vlaneseq
    %v1117 = vshrl.u32 %v1116, 7
    %v1118 = vsub.s32 1, %v1117
    %v1119 = vrot.slane %v1110, %v1118
    %v1120 = vlaneseq
    %v1121 = vshrl.u32 %v1120, 7
    %v1122 = vsub.s32 2, %v1121
    %v1123 = vrot.slane %v1110, %v1122
    %v1124 = vlaneseq
    %v1125 = vshrl.u32 %v1124, 7
    %v1126 = vsub.s32 3, %v1125
    %v1127 = vrot.slane %v1110, %v1126
    %v1128 = vlaneseq
    %v1129 = vshrl.u32 %v1128, 7
    %v1130 = vsub.s32 4, %v1129
    %v1131 = vrot.slane %v1110, %v1130
    %v1132 = vlaneseq
    %v1133 = vshrl.u32 %v1132, 7
    %v1134 = vsub.s32 5, %v1133
    %v1135 = vrot.slane %v1110, %v1134
    %v1136 = vlaneseq
    %v1137 = vshrl.u32 %v1136, 7
    %v1138 = vsub.s32 6, %v1137
    %v1139 = vrot.slane %v1110, %v1138
    %v1140 = vlaneseq
    %v1141 = vshrl.u32 %v1140, 7
    %v1142 = vsub.s32 7, %v1141
    %v1143 = vrot.slane %v1110, %v1142
    %v1216 = vunpack.c.l.b16 %v1046
    %v1217 = vunpack.c.h.b16 %v1046
    %v1218 = vunpack.c.l.b16 %v1047
    %v1219 = vunpack.c.h.b16 %v1047
    %v1220 = vunpack.c.l.b16 %v1048
    %v1221 = vunpack.c.h.b16 %v1048
    %v1222 = vunpack.c.l.b16 %v1049
    %v1223 = vunpack.c.h.b16 %v1049
    %v1224 = vunpack.c.l.b16 %v1050
    %v1225 = vunpack.c.h.b16 %v1050
    %v1226 = vunpack.c.l.b16 %v1051
    %v1227 = vunpack.c.h.b16 %v1051
    %v1228 = vunpack.c.l.b16 %v1052
    %v1229 = vunpack.c.h.b16 %v1052
    %v1230 = vunpack.c.l.b16 %v1053
    %v1231 = vunpack.c.h.b16 %v1053
    %v1232 = vunpack.c.l.b16 %v1054
    %v1233 = vunpack.c.h.b16 %v1054
    %v1234 = vunpack.c.l.b16 %v1055
    %v1235 = vunpack.c.h.b16 %v1055
    %v1236 = vunpack.c.l.b16 %v1056
    %v1237 = vunpack.c.h.b16 %v1056
    %v1238 = vunpack.c.l.b16 %v1057
    %v1239 = vunpack.c.h.b16 %v1057
    %v1240 = vunpack.c.l.b16 %v1058
    %v1241 = vunpack.c.h.b16 %v1058
    %v1242 = vunpack.c.l.b16 %v1059
    %v1243 = vunpack.c.h.b16 %v1059
    %v1244 = vunpack.c.l.b16 %v1060
    %v1245 = vunpack.c.h.b16 %v1060
    %v1246 = vunpack.c.l.b16 %v1061
    %v1247 = vunpack.c.h.b16 %v1061
    %v1248 = vunpack.c.l.b16 %v1062
    %v1249 = vunpack.c.h.b16 %v1062
    %v1250 = vunpack.c.l.b16 %v1063
    %v1251 = vunpack.c.h.b16 %v1063
    %v1252 = vunpack.c.l.b16 %v1064
    %v1253 = vunpack.c.h.b16 %v1064
    %v1254 = vunpack.c.l.b16 %v1065
    %v1255 = vunpack.c.h.b16 %v1065
    %v1256 = vunpack.c.l.b16 %v1066
    %v1257 = vunpack.c.h.b16 %v1066
    %v1258 = vunpack.c.l.b16 %v1067
    %v1259 = vunpack.c.h.b16 %v1067
    %v1260 = vunpack.c.l.b16 %v1068
    %v1261 = vunpack.c.h.b16 %v1068
    %v1262 = vunpack.c.l.b16 %v1069
    %v1263 = vunpack.c.h.b16 %v1069
    %v1264 = vunpack.c.l.b16 %v1070
    %v1265 = vunpack.c.h.b16 %v1070
    %v1266 = vunpack.c.l.b16 %v1071
    %v1267 = vunpack.c.h.b16 %v1071
    %v1268 = vunpack.c.l.b16 %v1072
    %v1269 = vunpack.c.h.b16 %v1072
    %v1270 = vunpack.c.l.b16 %v1073
    %v1271 = vunpack.c.h.b16 %v1073
    %v1272 = vunpack.c.l.b16 %v1074
    %v1273 = vunpack.c.h.b16 %v1074
    %v1274 = vunpack.c.l.b16 %v1075
    %v1275 = vunpack.c.h.b16 %v1075
    %v1276 = vunpack.c.l.b16 %v1076
    %v1277 = vunpack.c.h.b16 %v1076
    %v1278 = vunpack.c.l.b16 %v1077
    %v1279 = vunpack.c.h.b16 %v1077
    %v1280 = vunpack.c.l.b16 %v1078
    %v1281 = vunpack.c.h.b16 %v1078
    %v1282 = vunpack.c.l.b16 %v1079
    %v1283 = vunpack.c.h.b16 %v1079
    %v1284 = vunpack.c.l.b16 %v1080
    %v1285 = vunpack.c.h.b16 %v1080
    %v1286 = vunpack.c.l.b16 %v1081
    %v1287 = vunpack.c.h.b16 %v1081
    %v1288 = vunpack.c.l.b16 %v1082
    %v1289 = vunpack.c.h.b16 %v1082
    %v1290 = vunpack.c.l.b16 %v1083
    %v1291 = vunpack.c.h.b16 %v1083
    %v1292 = vunpack.c.l.b16 %v1084
    %v1293 = vunpack.c.h.b16 %v1084
    %v1294 = vunpack.c.l.b16 %v1085
    %v1295 = vunpack.c.h.b16 %v1085
    %v1296 = vunpack.c.l.b16 %v1086
    %v1297 = vunpack.c.h.b16 %v1086
    %v1298 = vunpack.c.l.b16 %v1087
    %v1299 = vunpack.c.h.b16 %v1087
    %v1300 = vunpack.c.l.b16 %v1088
    %v1301 = vunpack.c.h.b16 %v1088
    %v1302 = vunpack.c.l.b16 %v1089
    %v1303 = vunpack.c.h.b16 %v1089
    %v1304 = vunpack.c.l.b16 %v1090
    %v1305 = vunpack.c.h.b16 %v1090
    %v1306 = vunpack.c.l.b16 %v1091
    %v1307 = vunpack.c.h.b16 %v1091
    %v1308 = vunpack.c.l.b16 %v1092
    %v1309 = vunpack.c.h.b16 %v1092
    %v1310 = vunpack.c.l.b16 %v1093
    %v1311 = vunpack.c.h.b16 %v1093
    %v1312 = vunpack.c.l.b16 %v1094
    %v1313 = vunpack.c.h.b16 %v1094
    %v1314 = vunpack.c.l.b16 %v1095
    %v1315 = vunpack.c.h.b16 %v1095
    %v1316 = vunpack.c.l.b16 %v1096
    %v1317 = vunpack.c.h.b16 %v1096
    %v1318 = vunpack.c.l.b16 %v1097
    %v1319 = vunpack.c.h.b16 %v1097
    %v1320 = vunpack.c.l.b16 %v1098
    %v1321 = vunpack.c.h.b16 %v1098
    %v1322 = vunpack.c.l.b16 %v1099
    %v1323 = vunpack.c.h.b16 %v1099
    %v1324 = vunpack.c.l.b16 %v1100
    %v1325 = vunpack.c.h.b16 %v1100
    %v1326 = vunpack.c.l.b16 %v1101
    %v1327 = vunpack.c.h.b16 %v1101
    %v1328 = vunpack.c.l.b16 %v1102
    %v1329 = vunpack.c.h.b16 %v1102
    %v1330 = vunpack.c.l.b16 %v1103
    %v1331 = vunpack.c.h.b16 %v1103
    %v1332 = vunpack.c.l.b16 %v1104
    %v1333 = vunpack.c.h.b16 %v1104
    %v1334 = vunpack.c.l.b16 %v1105
    %v1335 = vunpack.c.h.b16 %v1105
    %v1336 = vunpack.c.l.b16 %v1106
    %v1337 = vunpack.c.h.b16 %v1106
    %v1338 = vunpack.c.l.b16 %v1107
    %v1339 = vunpack.c.h.b16 %v1107
    %v1340 = vunpack.c.l.b16 %v1108
    %v1341 = vunpack.c.h.b16 %v1108
    %v1342 = vunpack.c.l.b16 %v1109
    %v1343 = vunpack.c.h.b16 %v1109
    %v1344 = vpack.c.b16 %v1224, %v1216
    %v1345 = vpack.c.b16 %v1225, %v1217
    %v1346 = vpack.c.b16 %v1226, %v1218
    %v1347 = vpack.c.b16 %v1227, %v1219
    %v1348 = vpack.c.b16 %v1228, %v1220
    %v1349 = vpack.c.b16 %v1229, %v1221
    %v1350 = vpack.c.b16 %v1230, %v1222
    %v1351 = vpack.c.b16 %v1231, %v1223
    %v1352 = vpack.c.b16 %v1240, %v1232
    %v1353 = vpack.c.b16 %v1241, %v1233
    %v1354 = vpack.c.b16 %v1242, %v1234
    %v1355 = vpack.c.b16 %v1243, %v1235
    %v1356 = vpack.c.b16 %v1244, %v1236
    %v1357 = vpack.c.b16 %v1245, %v1237
    %v1358 = vpack.c.b16 %v1246, %v1238
    %v1359 = vpack.c.b16 %v1247, %v1239
    %v1360 = vpack.c.b16 %v1256, %v1248
    %v1361 = vpack.c.b16 %v1257, %v1249
    %v1362 = vpack.c.b16 %v1258, %v1250
    %v1363 = vpack.c.b16 %v1259, %v1251
    %v1364 = vpack.c.b16 %v1260, %v1252
    %v1365 = vpack.c.b16 %v1261, %v1253
    %v1366 = vpack.c.b16 %v1262, %v1254
    %v1367 = vpack.c.b16 %v1263, %v1255
    %v1368 = vpack.c.b16 %v1272, %v1264
    %v1369 = vpack.c.b16 %v1273, %v1265
    %v1370 = vpack.c.b16 %v1274, %v1266
    %v1371 = vpack.c.b16 %v1275, %v1267
    %v1372 = vpack.c.b16 %v1276, %v1268
    %v1373 = vpack.c.b16 %v1277, %v1269
    %v1374 = vpack.c.b16 %v1278, %v1270
    %v1375 = vpack.c.b16 %v1279, %v1271
    %v1376 = vpack.c.b16 %v1288, %v1280
    %v1377 = vpack.c.b16 %v1289, %v1281
    %v1378 = vpack.c.b16 %v1290, %v1282
    %v1379 = vpack.c.b16 %v1291, %v1283
    %v1380 = vpack.c.b16 %v1292, %v1284
    %v1381 = vpack.c.b16 %v1293, %v1285
    %v1382 = vpack.c.b16 %v1294, %v1286
    %v1383 = vpack.c.b16 %v1295, %v1287
    %v1384 = vpack.c.b16 %v1304, %v1296
    %v1385 = vpack.c.b16 %v1305, %v1297
    %v1386 = vpack.c.b16 %v1306, %v1298
    %v1387 = vpack.c.b16 %v1307, %v1299
    %v1388 = vpack.c.b16 %v1308, %v1300
    %v1389 = vpack.c.b16 %v1309, %v1301
    %v1390 = vpack.c.b16 %v1310, %v1302
    %v1391 = vpack.c.b16 %v1311, %v1303
    %v1392 = vpack.c.b16 %v1320, %v1312
    %v1393 = vpack.c.b16 %v1321, %v1313
    %v1394 = vpack.c.b16 %v1322, %v1314
    %v1395 = vpack.c.b16 %v1323, %v1315
    %v1396 = vpack.c.b16 %v1324, %v1316
    %v1397 = vpack.c.b16 %v1325, %v1317
    %v1398 = vpack.c.b16 %v1326, %v1318
    %v1399 = vpack.c.b16 %v1327, %v1319
    %v1400 = vpack.c.b16 %v1336, %v1328
    %v1401 = vpack.c.b16 %v1337, %v1329
    %v1402 = vpack.c.b16 %v1338, %v1330
    %v1403 = vpack.c.b16 %v1339, %v1331
    %v1404 = vpack.c.b16 %v1340, %v1332
    %v1405 = vpack.c.b16 %v1341, %v1333
    %v1406 = vpack.c.b16 %v1342, %v1334
    %v1407 = vpack.c.b16 %v1343, %v1335
    %1472 = vmatprep.subr.bf16.mxu0 %v1401
    %1473 = vmatpush1.bf16.msra.mxu0 %v1400
    %1474 = vmatprep.subr.bf16.mxu0 %v1393
    %1475 = vmatpush1.bf16.msra.mxu0 %v1392
    %1476 = vmatprep.subr.bf16.mxu0 %v1385
    %1477 = vmatpush1.bf16.msra.mxu0 %v1384
    %1478 = vmatprep.subr.bf16.mxu0 %v1377
    %1479 = vmatpush1.bf16.msra.mxu0 %v1376
    %1480 = vmatprep.subr.bf16.mxu0 %v1369
    %1481 = vmatpush1.bf16.msra.mxu0 %v1368
    %1482 = vmatprep.subr.bf16.mxu0 %v1361
    %1483 = vmatpush1.bf16.msra.mxu0 %v1360
    %1484 = vmatprep.subr.bf16.mxu0 %v1353
    %1485 = vmatpush1.bf16.msra.mxu0 %v1352
    %1486 = vmatprep.subr.bf16.mxu0 %v1345
    %1487 = vmatpush1.bf16.msra.mxu0 %v1344
    %1488 = vmatprep.subr.bf16.mxu0 0
    %1489 = vmatpush2.bf16.msra.mxu0 0
    %1490 = vmatprep.subr.bf16.mxu0 0
    %1491 = vmatpush2.bf16.msra.mxu0 0
    %1492 = vmatprep.subr.bf16.mxu0 0
    %1493 = vmatpush2.bf16.msra.mxu0 0
    %1494 = vmatprep.subr.bf16.mxu0 0
    %1495 = vmatpush2.bf16.msra.mxu0 0
    %1496 = vmatprep.subr.bf16.mxu0 0
    %1497 = vmatpush2.bf16.msra.mxu0 0
    %1498 = vmatprep.subr.bf16.mxu0 0
    %1499 = vmatpush2.bf16.msra.mxu0 0
    %1500 = vmatprep.subr.bf16.mxu0 0
    %1501 = vmatpush2.bf16.msra.mxu0 0
    %1502 = vmatprep.subr.bf16.mxu0 0
    %1503 = vmatpush2.bf16.msra.mxu0 0
    %1504 = vmatprep.mubr.bf16.mxu0 0
    %1505 = vmatmul.mubr.bf16.gmra.mxu0 %v1045
    %v1506 = vpop.f32.mrf.mxu0
    %v1507 = vadd.f32 %v1115, %v1506
    %v1508 = vpop.f32.mrf.mxu0
    %v1509 = vadd.f32 %v1119, %v1508
    %v1510 = vpop.f32.mrf.mxu0
    %v1511 = vadd.f32 %v1115, %v1510
    %v1512 = vpop.f32.mrf.mxu0
    %v1513 = vadd.f32 %v1119, %v1512
    %1514 = vdwg.mxu0
    %1515 = vmatprep.subr.bf16.mxu0 %v1403
    %1516 = vmatpush1.bf16.msra.mxu0 %v1402
    %1517 = vmatprep.subr.bf16.mxu0 %v1395
    %1518 = vmatpush1.bf16.msra.mxu0 %v1394
    %1519 = vmatprep.subr.bf16.mxu0 %v1387
    %1520 = vmatpush1.bf16.msra.mxu0 %v1386
    %1521 = vmatprep.subr.bf16.mxu0 %v1379
    %1522 = vmatpush1.bf16.msra.mxu0 %v1378
    %1523 = vmatprep.subr.bf16.mxu0 %v1371
    %1524 = vmatpush1.bf16.msra.mxu0 %v1370
    %1525 = vmatprep.subr.bf16.mxu0 %v1363
    %1526 = vmatpush1.bf16.msra.mxu0 %v1362
    %1527 = vmatprep.subr.bf16.mxu0 %v1355
    %1528 = vmatpush1.bf16.msra.mxu0 %v1354
    %1529 = vmatprep.subr.bf16.mxu0 %v1347
    %1530 = vmatpush1.bf16.msra.mxu0 %v1346
    %1531 = vmatprep.subr.bf16.mxu0 0
    %1532 = vmatpush2.bf16.msra.mxu0 0
    %1533 = vmatprep.subr.bf16.mxu0 0
    %1534 = vmatpush2.bf16.msra.mxu0 0
    %1535 = vmatprep.subr.bf16.mxu0 0
    %1536 = vmatpush2.bf16.msra.mxu0 0
    %1537 = vmatprep.subr.bf16.mxu0 0
    %1538 = vmatpush2.bf16.msra.mxu0 0
    %1539 = vmatprep.subr.bf16.mxu0 0
    %1540 = vmatpush2.bf16.msra.mxu0 0
    %1541 = vmatprep.subr.bf16.mxu0 0
    %1542 = vmatpush2.bf16.msra.mxu0 0
    %1543 = vmatprep.subr.bf16.mxu0 0
    %1544 = vmatpush2.bf16.msra.mxu0 0
    %1545 = vmatprep.subr.bf16.mxu0 0
    %1546 = vmatpush2.bf16.msra.mxu0 0
    %1547 = vmatprep.mubr.bf16.mxu0 0
    %1548 = vmatmul.mubr.bf16.gmra.mxu0 %v1045
    %v1549 = vpop.f32.mrf.mxu0
    %v1550 = vadd.f32 %v1123, %v1549
    %v1551 = vpop.f32.mrf.mxu0
    %v1552 = vadd.f32 %v1127, %v1551
    %v1553 = vpop.f32.mrf.mxu0
    %v1554 = vadd.f32 %v1123, %v1553
    %v1555 = vpop.f32.mrf.mxu0
    %v1556 = vadd.f32 %v1127, %v1555
    %1557 = vdwg.mxu0
    %1558 = vmatprep.subr.bf16.mxu0 %v1405
    %1559 = vmatpush1.bf16.msra.mxu0 %v1404
    %1560 = vmatprep.subr.bf16.mxu0 %v1397
    %1561 = vmatpush1.bf16.msra.mxu0 %v1396
    %1562 = vmatprep.subr.bf16.mxu0 %v1389
    %1563 = vmatpush1.bf16.msra.mxu0 %v1388
    %1564 = vmatprep.subr.bf16.mxu0 %v1381
    %1565 = vmatpush1.bf16.msra.mxu0 %v1380
    %1566 = vmatprep.subr.bf16.mxu0 %v1373
    %1567 = vmatpush1.bf16.msra.mxu0 %v1372
    %1568 = vmatprep.subr.bf16.mxu0 %v1365
    %1569 = vmatpush1.bf16.msra.mxu0 %v1364
    %1570 = vmatprep.subr.bf16.mxu0 %v1357
    %1571 = vmatpush1.bf16.msra.mxu0 %v1356
    %1572 = vmatprep.subr.bf16.mxu0 %v1349
    %1573 = vmatpush1.bf16.msra.mxu0 %v1348
    %1574 = vmatprep.subr.bf16.mxu0 0
    %1575 = vmatpush2.bf16.msra.mxu0 0
    %1576 = vmatprep.subr.bf16.mxu0 0
    %1577 = vmatpush2.bf16.msra.mxu0 0
    %1578 = vmatprep.subr.bf16.mxu0 0
    %1579 = vmatpush2.bf16.msra.mxu0 0
    %1580 = vmatprep.subr.bf16.mxu0 0
    %1581 = vmatpush2.bf16.msra.mxu0 0
    %1582 = vmatprep.subr.bf16.mxu0 0
    %1583 = vmatpush2.bf16.msra.mxu0 0
    %1584 = vmatprep.subr.bf16.mxu0 0
    %1585 = vmatpush2.bf16.msra.mxu0 0
    %1586 = vmatprep.subr.bf16.mxu0 0
    %1587 = vmatpush2.bf16.msra.mxu0 0
    %1588 = vmatprep.subr.bf16.mxu0 0
    %1589 = vmatpush2.bf16.msra.mxu0 0
    %1590 = vmatprep.mubr.bf16.mxu0 0
    %1591 = vmatmul.mubr.bf16.gmra.mxu0 %v1045
    %v1592 = vpop.f32.mrf.mxu0
    %v1593 = vadd.f32 %v1131, %v1592
    %v1594 = vpop.f32.mrf.mxu0
    %v1595 = vadd.f32 %v1135, %v1594
    %v1596 = vpop.f32.mrf.mxu0
    %v1597 = vadd.f32 %v1131, %v1596
    %v1598 = vpop.f32.mrf.mxu0
    %v1599 = vadd.f32 %v1135, %v1598
    %1600 = vdwg.mxu0
    %1601 = vmatprep.subr.bf16.mxu0 %v1407
    %1602 = vmatpush1.bf16.msra.mxu0 %v1406
    %1603 = vmatprep.subr.bf16.mxu0 %v1399
    %1604 = vmatpush1.bf16.msra.mxu0 %v1398
    %1605 = vmatprep.subr.bf16.mxu0 %v1391
    %1606 = vmatpush1.bf16.msra.mxu0 %v1390
    %1607 = vmatprep.subr.bf16.mxu0 %v1383
    %1608 = vmatpush1.bf16.msra.mxu0 %v1382
    %1609 = vmatprep.subr.bf16.mxu0 %v1375
    %1610 = vmatpush1.bf16.msra.mxu0 %v1374
    %1611 = vmatprep.subr.bf16.mxu0 %v1367
    %1612 = vmatpush1.bf16.msra.mxu0 %v1366
    %1613 = vmatprep.subr.bf16.mxu0 %v1359
    %1614 = vmatpush1.bf16.msra.mxu0 %v1358
    %1615 = vmatprep.subr.bf16.mxu0 %v1351
    %1616 = vmatpush1.bf16.msra.mxu0 %v1350
    %1617 = vmatprep.subr.bf16.mxu0 0
    %1618 = vmatpush2.bf16.msra.mxu0 0
    %1619 = vmatprep.subr.bf16.mxu0 0
    %1620 = vmatpush2.bf16.msra.mxu0 0
    %1621 = vmatprep.subr.bf16.mxu0 0
    %1622 = vmatpush2.bf16.msra.mxu0 0
    %1623 = vmatprep.subr.bf16.mxu0 0
    %1624 = vmatpush2.bf16.msra.mxu0 0
    %1625 = vmatprep.subr.bf16.mxu0 0
    %1626 = vmatpush2.bf16.msra.mxu0 0
    %1627 = vmatprep.subr.bf16.mxu0 0
    %1628 = vmatpush2.bf16.msra.mxu0 0
    %1629 = vmatprep.subr.bf16.mxu0 0
    %1630 = vmatpush2.bf16.msra.mxu0 0
    %1631 = vmatprep.subr.bf16.mxu0 0
    %1632 = vmatpush2.bf16.msra.mxu0 0
    %1633 = vmatprep.mubr.bf16.mxu0 0
    %1634 = vmatmul.mubr.bf16.gmra.mxu0 %v1045
    %v1635 = vpop.f32.mrf.mxu0
    %v1636 = vadd.f32 %v1139, %v1635
    %v1637 = vpop.f32.mrf.mxu0
    %v1638 = vadd.f32 %v1143, %v1637
    %v1639 = vpop.f32.mrf.mxu0
    %v1640 = vadd.f32 %v1139, %v1639
    %v1641 = vpop.f32.mrf.mxu0
    %v1642 = vadd.f32 %v1143, %v1641
    %1643 = vdwg.mxu0
    %v1644 = vxor.u32 %v1507, 2147483648
    %v1645 = vxor.u32 %v1509, 2147483648
    %v1646 = vxor.u32 %v1550, 2147483648
    %v1647 = vxor.u32 %v1552, 2147483648
    %v1648 = vxor.u32 %v1593, 2147483648
    %v1649 = vxor.u32 %v1595, 2147483648
    %v1650 = vxor.u32 %v1636, 2147483648
    %v1651 = vxor.u32 %v1638, 2147483648
    %v1652 = vxor.u32 %v1511, 2147483648
    %v1653 = vxor.u32 %v1513, 2147483648
    %v1654 = vxor.u32 %v1554, 2147483648
    %v1655 = vxor.u32 %v1556, 2147483648
    %v1656 = vxor.u32 %v1597, 2147483648
    %v1657 = vxor.u32 %v1599, 2147483648
    %v1658 = vxor.u32 %v1640, 2147483648
    %v1659 = vxor.u32 %v1642, 2147483648
    %v1660 = vmul.f32 %v1644, 1.442695
    %v1661 = vpow.pop %v1660
    %v1662 = vmul.f32 %v1645, 1.442695
    %v1663 = vpow.pop %v1662
    %v1664 = vmul.f32 %v1646, 1.442695
    %v1665 = vpow.pop %v1664
    %v1666 = vmul.f32 %v1647, 1.442695
    %v1667 = vpow.pop %v1666
    %v1668 = vmul.f32 %v1648, 1.442695
    %v1669 = vpow.pop %v1668
    %v1670 = vmul.f32 %v1649, 1.442695
    %v1671 = vpow.pop %v1670
    %v1672 = vmul.f32 %v1650, 1.442695
    %v1673 = vpow.pop %v1672
    %v1674 = vmul.f32 %v1651, 1.442695
    %v1675 = vpow.pop %v1674
    %v1676 = vmul.f32 %v1652, 1.442695
    %v1677 = vpow.pop %v1676
    %v1678 = vmul.f32 %v1653, 1.442695
    %v1679 = vpow.pop %v1678
    %v1680 = vmul.f32 %v1654, 1.442695
    %v1681 = vpow.pop %v1680
    %v1682 = vmul.f32 %v1655, 1.442695
    %v1683 = vpow.pop %v1682
    %v1684 = vmul.f32 %v1656, 1.442695
    %v1685 = vpow.pop %v1684
    %v1686 = vmul.f32 %v1657, 1.442695
    %v1687 = vpow.pop %v1686
    %v1688 = vmul.f32 %v1658, 1.442695
    %v1689 = vpow.pop %v1688
    %v1690 = vmul.f32 %v1659, 1.442695
    %v1691 = vpow.pop %v1690
    %v1692 = vadd.f32 %v1661, 1.0
    %v1693 = vadd.f32 %v1663, 1.0
    %v1694 = vadd.f32 %v1665, 1.0
    %v1695 = vadd.f32 %v1667, 1.0
    %v1696 = vadd.f32 %v1669, 1.0
    %v1697 = vadd.f32 %v1671, 1.0
    %v1698 = vadd.f32 %v1673, 1.0
    %v1699 = vadd.f32 %v1675, 1.0
    %v1700 = vadd.f32 %v1677, 1.0
    %v1701 = vadd.f32 %v1679, 1.0
    %v1702 = vadd.f32 %v1681, 1.0
    %v1703 = vadd.f32 %v1683, 1.0
    %v1704 = vadd.f32 %v1685, 1.0
    %v1705 = vadd.f32 %v1687, 1.0
    %v1706 = vadd.f32 %v1689, 1.0
    %v1707 = vadd.f32 %v1691, 1.0
    %v1708 = vrcp.pop %v1692
    %v1709 = vmul.f32 1.0, %v1708
    %v1710 = vrcp.pop %v1693
    %v1711 = vmul.f32 1.0, %v1710
    %v1712 = vrcp.pop %v1694
    %v1713 = vmul.f32 1.0, %v1712
    %v1714 = vrcp.pop %v1695
    %v1715 = vmul.f32 1.0, %v1714
    %v1716 = vrcp.pop %v1696
    %v1717 = vmul.f32 1.0, %v1716
    %v1718 = vrcp.pop %v1697
    %v1719 = vmul.f32 1.0, %v1718
    %v1720 = vrcp.pop %v1698
    %v1721 = vmul.f32 1.0, %v1720
    %v1722 = vrcp.pop %v1699
    %v1723 = vmul.f32 1.0, %v1722
    %v1724 = vrcp.pop %v1700
    %v1725 = vmul.f32 1.0, %v1724
    %v1726 = vrcp.pop %v1701
    %v1727 = vmul.f32 1.0, %v1726
    %v1728 = vrcp.pop %v1702
    %v1729 = vmul.f32 1.0, %v1728
    %v1730 = vrcp.pop %v1703
    %v1731 = vmul.f32 1.0, %v1730
    %v1732 = vrcp.pop %v1704
    %v1733 = vmul.f32 1.0, %v1732
    %v1734 = vrcp.pop %v1705
    %v1735 = vmul.f32 1.0, %v1734
    %v1736 = vrcp.pop %v1706
    %v1737 = vmul.f32 1.0, %v1736
    %v1738 = vrcp.pop %v1707
    %v1739 = vmul.f32 1.0, %v1738
    %v1740 = vpack.c.bf16 %v1725, %v1709
    %v1741 = vpack.c.bf16 %v1727, %v1711
    %v1742 = vpack.c.bf16 %v1729, %v1713
    %v1743 = vpack.c.bf16 %v1731, %v1715
    %v1744 = vpack.c.bf16 %v1733, %v1717
    %v1745 = vpack.c.bf16 %v1735, %v1719
    %v1746 = vpack.c.bf16 %v1737, %v1721
    %v1747 = vpack.c.bf16 %v1739, %v1723
    %v1756 = vunpack.c.l.b16 %v1740
    %v1757 = vunpack.c.l.b16 %v1741
    %v1758 = vunpack.c.l.b16 %v1742
    %v1759 = vunpack.c.l.b16 %v1743
    %v1760 = vunpack.c.l.b16 %v1744
    %v1761 = vunpack.c.l.b16 %v1745
    %v1762 = vunpack.c.l.b16 %v1746
    %v1763 = vunpack.c.l.b16 %v1747
    %v1764 = vunpack.c.h.b16 %v1740
    %v1765 = vunpack.c.h.b16 %v1741
    %v1766 = vunpack.c.h.b16 %v1742
    %v1767 = vunpack.c.h.b16 %v1743
    %v1768 = vunpack.c.h.b16 %v1744
    %v1769 = vunpack.c.h.b16 %v1745
    %v1770 = vunpack.c.h.b16 %v1746
    %v1771 = vunpack.c.h.b16 %v1747
    %v1772 = vpack.c.b16 %v1757, %v1756
    %v1773 = vpack.c.b16 %v1759, %v1758
    %v1774 = vpack.c.b16 %v1761, %v1760
    %v1775 = vpack.c.b16 %v1763, %v1762
    %v1776 = vpack.c.b16 %v1765, %v1764
    %v1777 = vpack.c.b16 %v1767, %v1766
    %v1778 = vpack.c.b16 %v1769, %v1768
    %v1779 = vpack.c.b16 %v1771, %v1770
    %1788 = vst [vmem:[%s10] sm:$0xff] %v1772
    %1789 = vst [vmem:[%s10 + $0x8] sm:$0xff] %v1773
    %1790 = vst [vmem:[%s10 + $0x10] sm:$0xff] %v1774
    %1791 = vst [vmem:[%s10 + $0x18] sm:$0xff] %v1775
    %1792 = vst [vmem:[%s10 + $0x20] sm:$0xff] %v1776
    %1793 = vst [vmem:[%s10 + $0x28] sm:$0xff] %v1777
    %1794 = vst [vmem:[%s10 + $0x30] sm:$0xff] %v1778
    %1795 = vst [vmem:[%s10 + $0x38] sm:$0xff] %v1779
    // Predicated region
    $region50: #{_lambda_.1} parent=1 // pred_check
      _
    $region51: #{_lambda_.1} parent=1 // pred_check_branch
      %1797 = sbr.rel (0) target = $region53
    $region52: #{_lambda_.1} parent=1 // pred_region
      _
    $region53: #{_lambda_.1} parent=1 // pred_fallthru
      _
    // Predicated region
    $region54: #{_lambda_.1} parent=1 // pred_check
      _
    $region55: #{_lambda_.1} parent=1 // pred_check_branch
      %1799 = sbr.rel (0) target = $region57
    $region56: #{_lambda_.1} parent=1 // pred_region
      _
    $region57: #{_lambda_.1} parent=1 // pred_fallthru
      _
    // Predicated region
    $region58: #{_lambda_.1} parent=1 // pred_check
      _
    $region59: #{_lambda_.1} parent=1 // pred_check_branch
      %1801 = sbr.rel (0) target = $region61
    $region60: #{_lambda_.1} parent=1 // pred_region
      _
    $region61: #{_lambda_.1} parent=1 // pred_fallthru
      _
    // Predicated region
    $region62: #{_lambda_.1} parent=1 // pred_check
      _
    $region63: #{_lambda_.1} parent=1 // pred_check_branch
      %1803 = sbr.rel (0) target = $region65
    $region64: #{_lambda_.1} parent=1 // pred_region
      _
    $region65: #{_lambda_.1} parent=1 // pred_fallthru
      _
    %1804 = vsyncpa [#allocation3], 1
    %1805 = vsyncpa [#allocation5], 1

</llo_original>
